<compile_context>
chip_gen: v6e
topology: v6e:2x2x1
jax: 0.10.0
libtpu: 0.0.40
codegen_flags: <defaults>
</compile_context>

<pallas_src>
import functools

import jax
import jax.numpy as jnp
from jax.experimental import pallas as pl
from jax.experimental.pallas import tpu as pltpu


# ----------------------------------------------------------------------------
# Kernel
# ----------------------------------------------------------------------------
def _bof_kernel(x_ref, w_ref, pool_ref, o_ref, *, eps2, scale, act_dtype):
    # x_ref    : [Cin+1, bt*HW]  bf16  (last row is ones  -> bias fold)
    # w_ref    : [K, Cin+1]      bf16  (a folded into W; last col = a*b + c)
    # pool_ref : [bt*HW, bt*P]   bf16  0/1 block-diagonal pooling indicator
    # o_ref    : [K, bt*P]       f32
    # 1x1 conv (+ bias) for the whole batch tile as a single bf16 MXU matmul.
    s = jnp.dot(w_ref[...], x_ref[...], preferred_element_type=jnp.float32)   # [K, N]
    # logistic kernel; the (t+1)/2 halving cancels in the normalization.
    # bf16 on v6e/v7x (EUP supports bf16), f32 on v5e.
    t = jnp.tanh(s.astype(act_dtype)) + 1.0                                   # EUP
    # normalizer accumulated in f32 regardless of act dtype.
    denom = jnp.sum(t.astype(jnp.float32), axis=0, keepdims=True) + eps2      # [1, N]
    # EUP approx reciprocal; n1 * n2 / split^2 folded in here (f32).
    inv = pl.reciprocal(denom, approx=True) * scale                           # [1, N]
    u = (t * inv.astype(act_dtype)).astype(jnp.bfloat16)                      # [K, N]
    # avg_pool2d(split) * n1 * n2 for all bt images as one bf16 MXU matmul,
    # written as a single lane-dense [K, bt*P] slab.
    o_ref[...] = jnp.dot(u, pool_ref[...], preferred_element_type=jnp.float32)


# ----------------------------------------------------------------------------
# Tiling / VMEM heuristics
# ----------------------------------------------------------------------------
def _device_kind():
    try:
        return jax.devices()[0].device_kind.lower()
    except Exception:
        return ""


def _lane(n):
    return -(-n // 128) * 128


def _sub(n, m=8):
    return -(-n // m) * m


def _est_block_bytes(bt, cin1, hw, k, p):
    n = bt * hw
    x_blk = _sub(cin1, 16) * _lane(n) * 2          # bf16 input block
    w_blk = _sub(k, 16) * _lane(cin1) * 2          # bf16 weights
    pool_blk = _sub(n, 16) * _lane(bt * p) * 2     # bf16 pooling matrix
    o_blk = _sub(k) * _lane(bt * p) * 4            # f32 output block
    work = 4 * _sub(k) * _lane(n) * 4              # s/t/u/denom temporaries
    return 2 * (x_blk + w_blk + pool_blk + o_blk) + work


def _pick_batch_tile(batch, cin1, hw, p, k, two_cores, requested=None):
    budget = (40 << 20) if two_cores else (80 << 20)

    def lane_ok(bt):
        # block last dims must be multiples of 128 unless they span the array.
        return bt == batch or ((bt * hw) % 128 == 0 and (bt * p) % 128 == 0)

    if requested is not None:
        bt = max(1, min(int(requested), batch))
        if batch % bt == 0 and lane_ok(bt):
            return bt

    cands = [bt for bt in range(1, batch + 1)
             if batch % bt == 0 and lane_ok(bt)
             and _est_block_bytes(bt, cin1, hw, k, p) <= budget]
    if not cands:
        cands = [bt for bt in range(1, batch + 1)
                 if batch % bt == 0 and lane_ok(bt)]
    if two_cores and batch > 1:
        multi = [bt for bt in cands if batch // bt >= 2]
        if multi:                      # keep both v7x TensorCores fed
            return max(multi)
    return max(cands)                  # single TC: fewest grid steps that fit


def _vmem_limit_bytes(bt, cin1, hw, k, p, two_cores):
    est = _est_block_bytes(bt, cin1, hw, k, p) + (4 << 20)
    # v7x: 64 MiB physical -> leave headroom; v5e/v6e: 128 MiB physical.
    cap = (56 << 20) if two_cores else (100 << 20)
    return int(min(max(32 << 20, est), cap))


# ----------------------------------------------------------------------------
# Wrapper
# ----------------------------------------------------------------------------
def logistic_conv_bof(x_nchw, weight, bias, a, c, n1, n2, split_horizon,
                      eps=5e-16, batch_tile=None, act_dtype=None):
    """x_nchw: [B, Cin, H, W]; weight: [K, Cin] (or [K, Cin, 1, 1]); bias: [K]."""
    B, Cin, H, W = x_nchw.shape
    weight = jnp.asarray(weight, jnp.float32)
    K = weight.shape[0]
    weight = weight.reshape(K, -1)

    Ho, Wo = H // split_horizon, W // split_horizon
    He, We = Ho * split_horizon, Wo * split_horizon
    HW, P = He * We, Ho * Wo
    Cin1 = Cin + 1

    kind = _device_kind()
    two_cores = ("v7" in kind) or ("7x" in kind)
    if act_dtype is None:
        # bf16 EUP only on v6e/v7x; f32 on v5e / unknown chips.
        act_dtype = jnp.bfloat16 if any(t in kind for t in ("v6", "v7", "7x")) \
            else jnp.float32

    bt = _pick_batch_tile(B, Cin1, HW, P, K, two_cores, batch_tile)
    N = bt * HW

    # ---- one fused XLA pass over x: truncate + transpose + ones row + bf16 ----
    # (the :He/:We truncation matches F.avg_pool2d discarding the remainder)
    x = x_nchw[:, :, :He, :We].reshape(B, Cin, HW)
    x = jnp.transpose(x, (1, 0, 2)).reshape(Cin, B * HW)
    x = jnp.concatenate([x, jnp.ones((1, B * HW), x.dtype)], axis=0)
    x = x.astype(jnp.bfloat16)                                    # [Cin+1, B*HW]

    # Fold the scalars: tanh(a*(Wx+b) + c) == tanh((aW)x + (a*b + c)).
    a_f = jnp.asarray(a, jnp.float32)
    c_f = jnp.asarray(c, jnp.float32)
    w = jnp.concatenate(
        [a_f * weight, (a_f * jnp.asarray(bias, jnp.float32) + c_f).reshape(K, 1)],
        axis=1).astype(jnp.bfloat16)                              # [K, Cin+1]

    # 0/1 pooling indicator (exact in bf16); the n1*n2/split^2 scale is applied
    # in-kernel in f32 so arbitrary learned n1/n2 stay accurate.
    hw_idx = jnp.arange(HW)
    win = (hw_idx // We // split_horizon) * Wo + (hw_idx % We) // split_horizon
    pool_t = win[:, None] == jnp.arange(P)[None, :]               # [HW, P] bool
    # Block-diagonal over the bt images of one grid step -> lane-dense output.
    # TODO(synk): tile the pooling matmul over HW for large images instead of
    #             materializing the O((bt*HW)*(bt*P)) block-diagonal matrix.
    pool_big = (jnp.eye(bt, dtype=bool)[:, None, :, None]
                & pool_t[None, :, None, :]).reshape(bt * HW, bt * P)
    pool_big = pool_big.astype(jnp.bfloat16)

    scale = float(n1) * float(n2) / float(split_horizon * split_horizon)

    out = pl.pallas_call(
        functools.partial(_bof_kernel, eps2=2.0 * float(eps), scale=scale,
                          act_dtype=act_dtype),
        out_shape=jax.ShapeDtypeStruct((K, B * P), jnp.float32),
        grid=(B // bt,),
        in_specs=[
            pl.BlockSpec((Cin1, N), lambda i: (0, i)),            # x (bf16)
            # w / pool_big have constant index_maps -> fetched once, not per step.
            pl.BlockSpec((K, Cin1), lambda i: (0, 0)),            # weights (bf16)
            pl.BlockSpec((bt * HW, bt * P), lambda i: (0, 0)),    # pool (bf16)
        ],
        out_specs=pl.BlockSpec((K, bt * P), lambda i: (0, i)),
        compiler_params=pltpu.CompilerParams(
            dimension_semantics=("parallel",),
            vmem_limit_bytes=_vmem_limit_bytes(bt, Cin1, HW, K, P, two_cores)),
        cost_estimate=pl.CostEstimate(
            flops=int(2 * B * K * HW * (Cin1 + bt * P)),
            transcendentals=int(B * K * HW),
            bytes_accessed=int(x.size * 2 + w.size * 2 + pool_big.size * 2
                               + K * B * P * 4)),
    )(x, w, pool_big)

    # [K, B*P] -> PyTorch's [B, K*Ho*Wo] flatten order.
    return jnp.transpose(out.reshape(K, B, P), (1, 0, 2)).reshape(B, K * P)


# ----------------------------------------------------------------------------
# Pure-JAX f32 reference (matches the PyTorch forward)
# ----------------------------------------------------------------------------
def reference(x_nchw, weight, bias, a, c, n1, n2, split, eps=5e-16):
    B, Cin, H, W = x_nchw.shape
    K = weight.shape[0]
    s = jnp.einsum("bchw,kc->bkhw", x_nchw, weight) + bias[None, :, None, None]
    s = jnp.tanh(a * s + c)
    s = (s + 1.0) / 2.0
    s = s / (jnp.sum(s, axis=1, keepdims=True) + eps) * n1
    Ho, Wo = H // split, W // split
    s = s[:, :, : Ho * split, : Wo * split]
    s = s.reshape(B, K, Ho, split, Wo, split).mean(axis=(3, 5)) * n2
    return s.reshape(B, -1)


if __name__ == "__main__":
    key = jax.random.PRNGKey(0)
    B, Cin, H, W = 4, 16, 16, 16     # input: [B, input_features, img, img]
    K = 64                           # n_codewords
    split = 2                        # split_horizon

    k1, k2, k3 = jax.random.split(key, 3)
    x = jax.random.normal(k1, (B, Cin, H, W), dtype=jnp.float32)

    # deterministic Conv2d-style init (uniform in +-1/sqrt(fan_in))
    bound = 1.0 / (Cin ** 0.5)
    weight = jax.random.uniform(k2, (K, Cin), jnp.float32, -bound, bound)
    bias = jax.random.uniform(k3, (K,), jnp.float32, -bound, bound)

    # learnable scalars exactly as in __init__
    a, c = 1.0, 0.0
    n1, n2 = float(K), float(split)

    out = logistic_conv_bof(x, weight, bias, a, c, n1, n2, split)
    out = jax.block_until_ready(out)

    ref = reference(x, weight, bias, a, c, n1, n2, split)
    assert out.shape == (B, K * (H // split) * (W // split)), out.shape
    err = float(jnp.max(jnp.abs(out - ref)))
    # bf16 conv / tanh / pooling paths + approx reciprocal vs pure-f32 reference.
    assert err < 5e-2, err
    print("KERNEL_OK")
</pallas_src>

<mosaic_0001>
module attributes {stable_mosaic.version = 11 : i64} {
  func.func @_bof_kernel(%arg0: i32, %arg1: memref<17x1024xbf16, #tpu.memory_space<vmem>>, %arg2: memref<64x17xbf16, #tpu.memory_space<vmem>>, %arg3: memref<1024x256xbf16, #tpu.memory_space<vmem>>, %arg4: memref<64x256xf32, #tpu.memory_space<vmem>>) attributes {dimension_semantics = [#tpu.dimension_semantics<parallel>], iteration_bounds = array<i64: 1>, scalar_prefetch = 0 : i64, scratch_operands = 0 : i64, tpu.core_type = #tpu.core_type<tc>, window_params = [{transform_indices = @transform_0, window_bounds = array<i64: 17, 1024>}, {pipeline_mode = #tpu.pipeline_mode<synchronous>, transform_indices = @transform_1, window_bounds = array<i64: 64, 17>}, {pipeline_mode = #tpu.pipeline_mode<synchronous>, transform_indices = @transform_2, window_bounds = array<i64: 1024, 256>}, {transform_indices = @transform_3, window_bounds = array<i64: 64, 256>}]} {
    %c0 = arith.constant 0 : index
    %c0_0 = arith.constant 0 : index
    %0 = vector.load %arg2[%c0, %c0_0] : memref<64x17xbf16, #tpu.memory_space<vmem>>, vector<64x17xbf16>
    %c0_1 = arith.constant 0 : index
    %c0_2 = arith.constant 0 : index
    %1 = vector.load %arg1[%c0_1, %c0_2] : memref<17x1024xbf16, #tpu.memory_space<vmem>>, vector<17x1024xbf16>
    %cst = arith.constant dense<0.000000e+00> : vector<64x1024xf32>
    %2 = tpu.matmul %0, %1, %cst {dimension_numbers = #tpu.dot_dimension_numbers<[1], [0], [0], [1], [0, 0, 1, 1], [], []>} : vector<64x17xbf16>, vector<17x1024xbf16>, vector<64x1024xf32> -> vector<64x1024xf32>
    %3 = math.tanh %2 : vector<64x1024xf32>
    %cst_3 = arith.constant 1.000000e+00 : f32
    %4 = vector.broadcast %cst_3 : f32 to vector<64x1024xf32>
    %5 = arith.addf %3, %4 : vector<64x1024xf32>
    %cst_4 = arith.constant dense<0.000000e+00> : vector<1024xf32>
    %6 = vector.multi_reduction <add>, %5, %cst_4 [0] : vector<64x1024xf32> to vector<1024xf32>
    %7 = vector.shape_cast %6 : vector<1024xf32> to vector<1x1024xf32>
    %cst_5 = arith.constant 1.000000e-15 : f32
    %8 = vector.broadcast %cst_5 : f32 to vector<1x1024xf32>
    %9 = arith.addf %7, %8 : vector<1x1024xf32>
    %10 = tpu.reciprocal %9 {approx = true} : vector<1x1024xf32> -> vector<1x1024xf32>
    %cst_6 = arith.constant 3.200000e+01 : f32
    %11 = vector.broadcast %cst_6 : f32 to vector<1x1024xf32>
    %12 = arith.mulf %10, %11 : vector<1x1024xf32>
    %13 = vector.broadcast %12 : vector<1x1024xf32> to vector<64x1024xf32>
    %14 = arith.mulf %5, %13 : vector<64x1024xf32>
    %15 = arith.truncf %14 : vector<64x1024xf32> to vector<64x1024xbf16>
    %c0_7 = arith.constant 0 : index
    %c0_8 = arith.constant 0 : index
    %16 = vector.load %arg3[%c0_7, %c0_8] : memref<1024x256xbf16, #tpu.memory_space<vmem>>, vector<1024x256xbf16>
    %cst_9 = arith.constant dense<0.000000e+00> : vector<64x256xf32>
    %17 = tpu.matmul %15, %16, %cst_9 {dimension_numbers = #tpu.dot_dimension_numbers<[1], [0], [0], [1], [0, 0, 1, 1], [], []>} : vector<64x1024xbf16>, vector<1024x256xbf16>, vector<64x256xf32> -> vector<64x256xf32>
    %c0_10 = arith.constant 0 : index
    %c0_11 = arith.constant 0 : index
    %18 = vector.load %arg4[%c0_10, %c0_11] : memref<64x256xf32, #tpu.memory_space<vmem>>, vector<64x256xf32>
    tpu.vector_store %arg4[%c0_10, %c0_11], %17 {strides = array<i32>} : memref<64x256xf32, #tpu.memory_space<vmem>>, vector<64x256xf32>,
    return
  }
  func.func @transform_0(%arg0: i32) -> (i32, i32) {
    %c0_i32 = arith.constant 0 : i32
    %c0_i32_0 = arith.constant 0 : i32
    return %c0_i32, %arg0 : i32, i32
  }
  func.func @transform_1(%arg0: i32) -> (i32, i32) {
    %c0_i32 = arith.constant 0 : i32
    %c0_i32_0 = arith.constant 0 : i32
    %c0_i32_1 = arith.constant 0 : i32
    return %c0_i32, %c0_i32_0 : i32, i32
  }
  func.func @transform_2(%arg0: i32) -> (i32, i32) {
    %c0_i32 = arith.constant 0 : i32
    %c0_i32_0 = arith.constant 0 : i32
    %c0_i32_1 = arith.constant 0 : i32
    return %c0_i32, %c0_i32_0 : i32, i32
  }
  func.func @transform_3(%arg0: i32) -> (i32, i32) {
    %c0_i32 = arith.constant 0 : i32
    %c0_i32_0 = arith.constant 0 : i32
    return %c0_i32, %arg0 : i32, i32
  }
}

</mosaic_0001>

<llo_original>
// kernel: tpu_custom_call.1
$region0: #{tpu_custom_call.1}
  #allocation0 [shape = 'u32[]', space=smem, size = 0x4, offset = 0x4, fixed_abs, tag = 'smem constant byte address 0x4 - core index']
  #allocation1 [shape = 'u32[144,128]{1,0:T(1,128)}', space=vmem, size = 0x12000, scoped, tag = 'internal scratch']
  %s0 = inlined_call_operand.hbm [shape: bf16[17,1024], index: 0, kind: input, shape index: {}]
  %s1 = inlined_call_operand.vmem [shape: bf16[64,17], index: 1, kind: input, shape index: {}]
  %s2 = inlined_call_operand.hbm [shape: bf16[1024,256], index: 2, kind: input, shape index: {}]
  %s3 = inlined_call_operand.hbm [shape: f32[64,256], index: 3, kind: output, shape index: {}]
  %s4 = sld [smem:[#allocation0]]
  $region30: #{tpu_custom_call.1} parent=0
    _
  %s6 = ssub.s32 1, %s4
  %s7 = scalar_select 0, %s6, %s4
  $region1: #{tpu_custom_call.1} parent=0
    #allocation2 [shape = 'u8[49152]{0}', space=vmem, size = 0xc000, scoped, tag = 'input window, operand 0, single buffered']
    #allocation3 [shape = 's32[1]{0}', space=sflag, size = 0x4, scoped, tag = 'scoped memory for tpu_custom_call.1']
    #allocation4 [shape = 's32[1]{0}', space=sflag, size = 0x4, scoped, tag = 'scoped memory for tpu_custom_call.1']
    #allocation5 [shape = 'u8[524288]{0}', space=vmem, size = 0x80000, scoped, tag = 'input window, operand 2, single buffered']
    #allocation6 [shape = 's32[1]{0}', space=sflag, size = 0x4, scoped, tag = 'scoped memory for tpu_custom_call.1']
    #allocation7 [shape = 'u8[65536]{0}', space=vmem, size = 0x10000, scoped, tag = 'output window, operand 0, single buffered']
    %8 = vsyncpa [#allocation3], 0
    %9 = vsyncpa [#allocation6], 0
    %10 = vsyncpa [#allocation4], 0
    // Predicated region
    $region2: #{tpu_custom_call.1} parent=1 // pred_check
      _
    $region3: #{tpu_custom_call.1} parent=1 // pred_check_branch
      %12 = sbr.rel (0) target = $region5
    $region4: #{tpu_custom_call.1} parent=1 // pred_region
      %s14 = ssub.s32 1536, 1536
      %15 = vsyncadd [#allocation3], %s14
      %s16 = sshll.u32 [#allocation2], 4
      %s17 = int_to_ptr.vmem [resolvable:$true] %s16
      %22 = dma.hbm_to_vmem [thread:$0]  %s0, 1536, %s17, [#allocation3], 512, 512, 32
    $region5: #{tpu_custom_call.1} parent=1 // pred_fallthru
      _
    // Predicated region
    $region6: #{tpu_custom_call.1} parent=1 // pred_check
      _
    $region7: #{tpu_custom_call.1} parent=1 // pred_check_branch
      %24 = sbr.rel (0) target = $region9
    $region8: #{tpu_custom_call.1} parent=1 // pred_region
      _
    $region9: #{tpu_custom_call.1} parent=1 // pred_fallthru
      _
    // Predicated region
    $region10: #{tpu_custom_call.1} parent=1 // pred_check
      _
    $region11: #{tpu_custom_call.1} parent=1 // pred_check_branch
      %26 = sbr.rel (0) target = $region13
    $region12: #{tpu_custom_call.1} parent=1 // pred_region
      %s28 = ssub.s32 16384, 16384
      %29 = vsyncadd [#allocation6], %s28
      %s30 = sshll.u32 [#allocation5], 4
      %s31 = int_to_ptr.vmem [resolvable:$true] %s30
      %36 = dma.hbm_to_vmem [thread:$0]  %s2, 16384, %s31, [#allocation6], 128, 128, 8
    $region13: #{tpu_custom_call.1} parent=1 // pred_fallthru
      _
    // Predicated region
    $region14: #{tpu_custom_call.1} parent=1 // pred_check
      _
    $region15: #{tpu_custom_call.1} parent=1 // pred_check_branch
      %38 = sbr.rel (0) target = $region17
    $region16: #{tpu_custom_call.1} parent=1 // pred_region
      %39 = dma.done [#allocation3], 1536
    $region17: #{tpu_custom_call.1} parent=1 // pred_fallthru
      _
    // Predicated region
    $region18: #{tpu_custom_call.1} parent=1 // pred_check
      _
    $region19: #{tpu_custom_call.1} parent=1 // pred_check_branch
      %41 = sbr.rel (0) target = $region21
    $region20: #{tpu_custom_call.1} parent=1 // pred_region
      %42 = dma.done [#allocation6], 16384
    $region21: #{tpu_custom_call.1} parent=1 // pred_fallthru
      _
    %v44 = vld [vmem:[%s1] sm:$0xf]
    %v45 = vld [vmem:[%s1 + $0x4] sm:$0xf]
    %v46 = vld [vmem:[%s1 + $0x8] sm:$0xf]
    %v47 = vld [vmem:[%s1 + $0xc] sm:$0xf]
    %v48 = vld [vmem:[%s1 + $0x10] sm:$0xf]
    %v49 = vld [vmem:[%s1 + $0x14] sm:$0xf]
    %v50 = vld [vmem:[%s1 + $0x18] sm:$0xf]
    %v51 = vld [vmem:[%s1 + $0x1c] sm:$0xf]
    %v52 = vld [vmem:[#allocation2] sm:$0xff]
    %v53 = vld [vmem:[#allocation2 + $0x8] sm:$0xff]
    %v54 = vld [vmem:[#allocation2 + $0x10] sm:$0xff]
    %v55 = vld [vmem:[#allocation2 + $0x18] sm:$0xff]
    %v56 = vld [vmem:[#allocation2 + $0x20] sm:$0xff]
    %v57 = vld [vmem:[#allocation2 + $0x28] sm:$0xff]
    %v58 = vld [vmem:[#allocation2 + $0x30] sm:$0xff]
    %v59 = vld [vmem:[#allocation2 + $0x38] sm:$0xff]
    %v60 = vld [vmem:[#allocation2 + $0x40] sm:$0x11]
    %v61 = vld [vmem:[#allocation2 + $0x48] sm:$0x11]
    %v62 = vld [vmem:[#allocation2 + $0x50] sm:$0x11]
    %v63 = vld [vmem:[#allocation2 + $0x58] sm:$0x11]
    %v72 = vunpack.c.l.b16 %v44
    %v73 = vunpack.c.l.b16 %v45
    %v74 = vunpack.c.l.b16 %v46
    %v75 = vunpack.c.l.b16 %v47
    %v76 = vunpack.c.l.b16 %v48
    %v77 = vunpack.c.l.b16 %v49
    %v78 = vunpack.c.l.b16 %v50
    %v79 = vunpack.c.l.b16 %v51
    %v80 = vpack.c.b16 %v73, %v72
    %v81 = vpack.c.b16 %v75, %v74
    %v82 = vpack.c.b16 %v77, %v76
    %v83 = vpack.c.b16 %v79, %v78
    %v96 = vunpack.c.l.b16 %v52
    %v97 = vunpack.c.h.b16 %v52
    %v98 = vunpack.c.l.b16 %v53
    %v99 = vunpack.c.h.b16 %v53
    %v100 = vunpack.c.l.b16 %v54
    %v101 = vunpack.c.h.b16 %v54
    %v102 = vunpack.c.l.b16 %v55
    %v103 = vunpack.c.h.b16 %v55
    %v104 = vunpack.c.l.b16 %v56
    %v105 = vunpack.c.h.b16 %v56
    %v106 = vunpack.c.l.b16 %v57
    %v107 = vunpack.c.h.b16 %v57
    %v108 = vunpack.c.l.b16 %v58
    %v109 = vunpack.c.h.b16 %v58
    %v110 = vunpack.c.l.b16 %v59
    %v111 = vunpack.c.h.b16 %v59
    %v112 = vunpack.c.l.b16 %v60
    %v113 = vunpack.c.h.b16 %v60
    %v114 = vunpack.c.l.b16 %v61
    %v115 = vunpack.c.h.b16 %v61
    %v116 = vunpack.c.l.b16 %v62
    %v117 = vunpack.c.h.b16 %v62
    %v118 = vunpack.c.l.b16 %v63
    %v119 = vunpack.c.h.b16 %v63
    %v120 = vpack.c.b16 %v104, %v96
    %v121 = vpack.c.b16 %v105, %v97
    %v122 = vpack.c.b16 %v106, %v98
    %v123 = vpack.c.b16 %v107, %v99
    %v124 = vpack.c.b16 %v108, %v100
    %v125 = vpack.c.b16 %v109, %v101
    %v126 = vpack.c.b16 %v110, %v102
    %v127 = vpack.c.b16 %v111, %v103
    %v128 = vpack.c.b16 %v112, %v112
    %v129 = vpack.c.b16 %v113, %v113
    %v130 = vpack.c.b16 %v114, %v114
    %v131 = vpack.c.b16 %v115, %v115
    %v132 = vpack.c.b16 %v116, %v116
    %v133 = vpack.c.b16 %v117, %v117
    %v134 = vpack.c.b16 %v118, %v118
    %v135 = vpack.c.b16 %v119, %v119
    %vm144 = vcmask 138240
    %v146 = vsel %vm144, %v80, 0
    %v149 = vsel %vm144, %v81, 0
    %v152 = vsel %vm144, %v82, 0
    %v155 = vsel %vm144, %v83, 0
    %vm157 = vcmask 1040384
    %v158 = vsel 0, 4294967295, 65535
    %v159 = vsel %vm157, %v158, 0
    %v161 = vand.u32 %v128, %v159
    %v164 = vand.u32 %v129, %v159
    %v167 = vand.u32 %v130, %v159
    %v170 = vand.u32 %v131, %v159
    %v173 = vand.u32 %v132, %v159
    %v176 = vand.u32 %v133, %v159
    %v179 = vand.u32 %v134, %v159
    %v182 = vand.u32 %v135, %v159
    %184 = vmatprep.subr.bf16.mxu0 0
    %185 = vmatpush1.bf16.msra.mxu0 0
    %186 = vmatprep.subr.bf16.mxu0 0
    %187 = vmatpush1.bf16.msra.mxu0 0
    %188 = vmatprep.subr.bf16.mxu0 0
    %189 = vmatpush1.bf16.msra.mxu0 0
    %190 = vmatprep.subr.bf16.mxu0 0
    %191 = vmatpush1.bf16.msra.mxu0 0
    %192 = vmatprep.subr.bf16.mxu0 0
    %193 = vmatpush1.bf16.msra.mxu0 0
    %194 = vmatprep.subr.bf16.mxu0 0
    %195 = vmatpush1.bf16.msra.mxu0 0
    %196 = vmatprep.subr.bf16.mxu0 %v164
    %197 = vmatpush1.bf16.msra.mxu0 %v161
    %198 = vmatprep.subr.bf16.mxu0 %v121
    %199 = vmatpush1.bf16.msra.mxu0 %v120
    %200 = vmatprep.subr.bf16.mxu0 0
    %201 = vmatpush2.bf16.msra.mxu0 0
    %202 = vmatprep.subr.bf16.mxu0 0
    %203 = vmatpush2.bf16.msra.mxu0 0
    %204 = vmatprep.subr.bf16.mxu0 0
    %205 = vmatpush2.bf16.msra.mxu0 0
    %206 = vmatprep.subr.bf16.mxu0 0
    %207 = vmatpush2.bf16.msra.mxu0 0
    %208 = vmatprep.subr.bf16.mxu0 0
    %209 = vmatpush2.bf16.msra.mxu0 0
    %210 = vmatprep.subr.bf16.mxu0 0
    %211 = vmatpush2.bf16.msra.mxu0 0
    %212 = vmatprep.subr.bf16.mxu0 0
    %213 = vmatpush2.bf16.msra.mxu0 0
    %214 = vmatprep.subr.bf16.mxu0 0
    %215 = vmatpush2.bf16.msra.mxu0 0
    %216 = vmatprep.mubr.bf16.mxu0 0
    %217 = vmatmul.mubr.bf16.gmra.mxu0 %v146
    %v218 = vpop.f32.mrf.mxu0
    %v219 = vadd.f32 0.0, %v218
    %v220 = vpop.f32.mrf.mxu0
    %v221 = vadd.f32 0.0, %v220
    %v222 = vpop.f32.mrf.mxu0
    %v223 = vadd.f32 0.0, %v222
    %v224 = vpop.f32.mrf.mxu0
    %v225 = vadd.f32 0.0, %v224
    %226 = vmatprep.mubr.bf16.mxu0 0
    %227 = vmatmul.mubr.bf16.gmra.mxu0 %v149
    %v228 = vpop.f32.mrf.mxu0
    %v229 = vadd.f32 0.0, %v228
    %v230 = vpop.f32.mrf.mxu0
    %v231 = vadd.f32 0.0, %v230
    %v232 = vpop.f32.mrf.mxu0
    %v233 = vadd.f32 0.0, %v232
    %v234 = vpop.f32.mrf.mxu0
    %v235 = vadd.f32 0.0, %v234
    %236 = vmatprep.mubr.bf16.mxu0 0
    %237 = vmatmul.mubr.bf16.gmra.mxu0 %v152
    %v238 = vpop.f32.mrf.mxu0
    %v239 = vadd.f32 0.0, %v238
    %v240 = vpop.f32.mrf.mxu0
    %v241 = vadd.f32 0.0, %v240
    %v242 = vpop.f32.mrf.mxu0
    %v243 = vadd.f32 0.0, %v242
    %v244 = vpop.f32.mrf.mxu0
    %v245 = vadd.f32 0.0, %v244
    %246 = vmatprep.mubr.bf16.mxu0 0
    %247 = vmatmul.mubr.bf16.gmra.mxu0 %v155
    %v248 = vpop.f32.mrf.mxu0
    %v249 = vadd.f32 0.0, %v248
    %v250 = vpop.f32.mrf.mxu0
    %v251 = vadd.f32 0.0, %v250
    %v252 = vpop.f32.mrf.mxu0
    %v253 = vadd.f32 0.0, %v252
    %v254 = vpop.f32.mrf.mxu0
    %v255 = vadd.f32 0.0, %v254
    %256 = vdwg.mxu0
    %257 = vmatprep.subr.bf16.mxu0 0
    %258 = vmatpush1.bf16.msra.mxu0 0
    %259 = vmatprep.subr.bf16.mxu0 0
    %260 = vmatpush1.bf16.msra.mxu0 0
    %261 = vmatprep.subr.bf16.mxu0 0
    %262 = vmatpush1.bf16.msra.mxu0 0
    %263 = vmatprep.subr.bf16.mxu0 0
    %264 = vmatpush1.bf16.msra.mxu0 0
    %265 = vmatprep.subr.bf16.mxu0 0
    %266 = vmatpush1.bf16.msra.mxu0 0
    %267 = vmatprep.subr.bf16.mxu0 0
    %268 = vmatpush1.bf16.msra.mxu0 0
    %269 = vmatprep.subr.bf16.mxu0 %v170
    %270 = vmatpush1.bf16.msra.mxu0 %v167
    %271 = vmatprep.subr.bf16.mxu0 %v123
    %272 = vmatpush1.bf16.msra.mxu0 %v122
    %273 = vmatprep.subr.bf16.mxu0 0
    %274 = vmatpush2.bf16.msra.mxu0 0
    %275 = vmatprep.subr.bf16.mxu0 0
    %276 = vmatpush2.bf16.msra.mxu0 0
    %277 = vmatprep.subr.bf16.mxu0 0
    %278 = vmatpush2.bf16.msra.mxu0 0
    %279 = vmatprep.subr.bf16.mxu0 0
    %280 = vmatpush2.bf16.msra.mxu0 0
    %281 = vmatprep.subr.bf16.mxu0 0
    %282 = vmatpush2.bf16.msra.mxu0 0
    %283 = vmatprep.subr.bf16.mxu0 0
    %284 = vmatpush2.bf16.msra.mxu0 0
    %285 = vmatprep.subr.bf16.mxu0 0
    %286 = vmatpush2.bf16.msra.mxu0 0
    %287 = vmatprep.subr.bf16.mxu0 0
    %288 = vmatpush2.bf16.msra.mxu0 0
    %289 = vmatprep.mubr.bf16.mxu0 0
    %290 = vmatmul.mubr.bf16.gmra.mxu0 %v146
    %v291 = vpop.f32.mrf.mxu0
    %v292 = vadd.f32 0.0, %v291
    %v293 = vpop.f32.mrf.mxu0
    %v294 = vadd.f32 0.0, %v293
    %v295 = vpop.f32.mrf.mxu0
    %v296 = vadd.f32 0.0, %v295
    %v297 = vpop.f32.mrf.mxu0
    %v298 = vadd.f32 0.0, %v297
    %299 = vmatprep.mubr.bf16.mxu0 0
    %300 = vmatmul.mubr.bf16.gmra.mxu0 %v149
    %v301 = vpop.f32.mrf.mxu0
    %v302 = vadd.f32 0.0, %v301
    %v303 = vpop.f32.mrf.mxu0
    %v304 = vadd.f32 0.0, %v303
    %v305 = vpop.f32.mrf.mxu0
    %v306 = vadd.f32 0.0, %v305
    %v307 = vpop.f32.mrf.mxu0
    %v308 = vadd.f32 0.0, %v307
    %309 = vmatprep.mubr.bf16.mxu0 0
    %310 = vmatmul.mubr.bf16.gmra.mxu0 %v152
    %v311 = vpop.f32.mrf.mxu0
    %v312 = vadd.f32 0.0, %v311
    %v313 = vpop.f32.mrf.mxu0
    %v314 = vadd.f32 0.0, %v313
    %v315 = vpop.f32.mrf.mxu0
    %v316 = vadd.f32 0.0, %v315
    %v317 = vpop.f32.mrf.mxu0
    %v318 = vadd.f32 0.0, %v317
    %319 = vmatprep.mubr.bf16.mxu0 0
    %320 = vmatmul.mubr.bf16.gmra.mxu0 %v155
    %v321 = vpop.f32.mrf.mxu0
    %v322 = vadd.f32 0.0, %v321
    %v323 = vpop.f32.mrf.mxu0
    %v324 = vadd.f32 0.0, %v323
    %v325 = vpop.f32.mrf.mxu0
    %v326 = vadd.f32 0.0, %v325
    %v327 = vpop.f32.mrf.mxu0
    %v328 = vadd.f32 0.0, %v327
    %329 = vdwg.mxu0
    %330 = vmatprep.subr.bf16.mxu0 0
    %331 = vmatpush1.bf16.msra.mxu0 0
    %332 = vmatprep.subr.bf16.mxu0 0
    %333 = vmatpush1.bf16.msra.mxu0 0
    %334 = vmatprep.subr.bf16.mxu0 0
    %335 = vmatpush1.bf16.msra.mxu0 0
    %336 = vmatprep.subr.bf16.mxu0 0
    %337 = vmatpush1.bf16.msra.mxu0 0
    %338 = vmatprep.subr.bf16.mxu0 0
    %339 = vmatpush1.bf16.msra.mxu0 0
    %340 = vmatprep.subr.bf16.mxu0 0
    %341 = vmatpush1.bf16.msra.mxu0 0
    %342 = vmatprep.subr.bf16.mxu0 %v176
    %343 = vmatpush1.bf16.msra.mxu0 %v173
    %344 = vmatprep.subr.bf16.mxu0 %v125
    %345 = vmatpush1.bf16.msra.mxu0 %v124
    %346 = vmatprep.subr.bf16.mxu0 0
    %347 = vmatpush2.bf16.msra.mxu0 0
    %348 = vmatprep.subr.bf16.mxu0 0
    %349 = vmatpush2.bf16.msra.mxu0 0
    %350 = vmatprep.subr.bf16.mxu0 0
    %351 = vmatpush2.bf16.msra.mxu0 0
    %352 = vmatprep.subr.bf16.mxu0 0
    %353 = vmatpush2.bf16.msra.mxu0 0
    %354 = vmatprep.subr.bf16.mxu0 0
    %355 = vmatpush2.bf16.msra.mxu0 0
    %356 = vmatprep.subr.bf16.mxu0 0
    %357 = vmatpush2.bf16.msra.mxu0 0
    %358 = vmatprep.subr.bf16.mxu0 0
    %359 = vmatpush2.bf16.msra.mxu0 0
    %360 = vmatprep.subr.bf16.mxu0 0
    %361 = vmatpush2.bf16.msra.mxu0 0
    %362 = vmatprep.mubr.bf16.mxu0 0
    %363 = vmatmul.mubr.bf16.gmra.mxu0 %v146
    %v364 = vpop.f32.mrf.mxu0
    %v365 = vadd.f32 0.0, %v364
    %v366 = vpop.f32.mrf.mxu0
    %v367 = vadd.f32 0.0, %v366
    %v368 = vpop.f32.mrf.mxu0
    %v369 = vadd.f32 0.0, %v368
    %v370 = vpop.f32.mrf.mxu0
    %v371 = vadd.f32 0.0, %v370
    %372 = vmatprep.mubr.bf16.mxu0 0
    %373 = vmatmul.mubr.bf16.gmra.mxu0 %v149
    %v374 = vpop.f32.mrf.mxu0
    %v375 = vadd.f32 0.0, %v374
    %v376 = vpop.f32.mrf.mxu0
    %v377 = vadd.f32 0.0, %v376
    %v378 = vpop.f32.mrf.mxu0
    %v379 = vadd.f32 0.0, %v378
    %v380 = vpop.f32.mrf.mxu0
    %v381 = vadd.f32 0.0, %v380
    %382 = vmatprep.mubr.bf16.mxu0 0
    %383 = vmatmul.mubr.bf16.gmra.mxu0 %v152
    %v384 = vpop.f32.mrf.mxu0
    %v385 = vadd.f32 0.0, %v384
    %v386 = vpop.f32.mrf.mxu0
    %v387 = vadd.f32 0.0, %v386
    %v388 = vpop.f32.mrf.mxu0
    %v389 = vadd.f32 0.0, %v388
    %v390 = vpop.f32.mrf.mxu0
    %v391 = vadd.f32 0.0, %v390
    %392 = vmatprep.mubr.bf16.mxu0 0
    %393 = vmatmul.mubr.bf16.gmra.mxu0 %v155
    %v394 = vpop.f32.mrf.mxu0
    %v395 = vadd.f32 0.0, %v394
    %v396 = vpop.f32.mrf.mxu0
    %v397 = vadd.f32 0.0, %v396
    %v398 = vpop.f32.mrf.mxu0
    %v399 = vadd.f32 0.0, %v398
    %v400 = vpop.f32.mrf.mxu0
    %v401 = vadd.f32 0.0, %v400
    %402 = vdwg.mxu0
    %403 = vmatprep.subr.bf16.mxu0 0
    %404 = vmatpush1.bf16.msra.mxu0 0
    %405 = vmatprep.subr.bf16.mxu0 0
    %406 = vmatpush1.bf16.msra.mxu0 0
    %407 = vmatprep.subr.bf16.mxu0 0
    %408 = vmatpush1.bf16.msra.mxu0 0
    %409 = vmatprep.subr.bf16.mxu0 0
    %410 = vmatpush1.bf16.msra.mxu0 0
    %411 = vmatprep.subr.bf16.mxu0 0
    %412 = vmatpush1.bf16.msra.mxu0 0
    %413 = vmatprep.subr.bf16.mxu0 0
    %414 = vmatpush1.bf16.msra.mxu0 0
    %415 = vmatprep.subr.bf16.mxu0 %v182
    %416 = vmatpush1.bf16.msra.mxu0 %v179
    %417 = vmatprep.subr.bf16.mxu0 %v127
    %418 = vmatpush1.bf16.msra.mxu0 %v126
    %419 = vmatprep.subr.bf16.mxu0 0
    %420 = vmatpush2.bf16.msra.mxu0 0
    %421 = vmatprep.subr.bf16.mxu0 0
    %422 = vmatpush2.bf16.msra.mxu0 0
    %423 = vmatprep.subr.bf16.mxu0 0
    %424 = vmatpush2.bf16.msra.mxu0 0
    %425 = vmatprep.subr.bf16.mxu0 0
    %426 = vmatpush2.bf16.msra.mxu0 0
    %427 = vmatprep.subr.bf16.mxu0 0
    %428 = vmatpush2.bf16.msra.mxu0 0
    %429 = vmatprep.subr.bf16.mxu0 0
    %430 = vmatpush2.bf16.msra.mxu0 0
    %431 = vmatprep.subr.bf16.mxu0 0
    %432 = vmatpush2.bf16.msra.mxu0 0
    %433 = vmatprep.subr.bf16.mxu0 0
    %434 = vmatpush2.bf16.msra.mxu0 0
    %435 = vmatprep.mubr.bf16.mxu0 0
    %436 = vmatmul.mubr.bf16.gmra.mxu0 %v146
    %v437 = vpop.f32.mrf.mxu0
    %v438 = vadd.f32 0.0, %v437
    %v439 = vpop.f32.mrf.mxu0
    %v440 = vadd.f32 0.0, %v439
    %v441 = vpop.f32.mrf.mxu0
    %v442 = vadd.f32 0.0, %v441
    %v443 = vpop.f32.mrf.mxu0
    %v444 = vadd.f32 0.0, %v443
    %445 = vmatprep.mubr.bf16.mxu0 0
    %446 = vmatmul.mubr.bf16.gmra.mxu0 %v149
    %v447 = vpop.f32.mrf.mxu0
    %v448 = vadd.f32 0.0, %v447
    %v449 = vpop.f32.mrf.mxu0
    %v450 = vadd.f32 0.0, %v449
    %v451 = vpop.f32.mrf.mxu0
    %v452 = vadd.f32 0.0, %v451
    %v453 = vpop.f32.mrf.mxu0
    %v454 = vadd.f32 0.0, %v453
    %455 = vmatprep.mubr.bf16.mxu0 0
    %456 = vmatmul.mubr.bf16.gmra.mxu0 %v152
    %v457 = vpop.f32.mrf.mxu0
    %v458 = vadd.f32 0.0, %v457
    %v459 = vpop.f32.mrf.mxu0
    %v460 = vadd.f32 0.0, %v459
    %v461 = vpop.f32.mrf.mxu0
    %v462 = vadd.f32 0.0, %v461
    %v463 = vpop.f32.mrf.mxu0
    %v464 = vadd.f32 0.0, %v463
    %465 = vmatprep.mubr.bf16.mxu0 0
    %466 = vmatmul.mubr.bf16.gmra.mxu0 %v155
    %v467 = vpop.f32.mrf.mxu0
    %v468 = vadd.f32 0.0, %v467
    %v469 = vpop.f32.mrf.mxu0
    %v470 = vadd.f32 0.0, %v469
    %v471 = vpop.f32.mrf.mxu0
    %v472 = vadd.f32 0.0, %v471
    %v473 = vpop.f32.mrf.mxu0
    %v474 = vadd.f32 0.0, %v473
    %475 = vdwg.mxu0
    %v476 = vtanh.pop %v219
    %v477 = vtanh.pop %v221
    %v478 = vtanh.pop %v292
    %v479 = vtanh.pop %v294
    %v480 = vtanh.pop %v365
    %v481 = vtanh.pop %v367
    %v482 = vtanh.pop %v438
    %v483 = vtanh.pop %v440
    %v484 = vtanh.pop %v223
    %v485 = vtanh.pop %v225
    %v486 = vtanh.pop %v296
    %v487 = vtanh.pop %v298
    %v488 = vtanh.pop %v369
    %v489 = vtanh.pop %v371
    %v490 = vtanh.pop %v442
    %v491 = vtanh.pop %v444
    %v492 = vtanh.pop %v229
    %v493 = vtanh.pop %v231
    %v494 = vtanh.pop %v302
    %v495 = vtanh.pop %v304
    %v496 = vtanh.pop %v375
    %v497 = vtanh.pop %v377
    %v498 = vtanh.pop %v448
    %v499 = vtanh.pop %v450
    %v500 = vtanh.pop %v233
    %v501 = vtanh.pop %v235
    %v502 = vtanh.pop %v306
    %v503 = vtanh.pop %v308
    %v504 = vtanh.pop %v379
    %v505 = vtanh.pop %v381
    %v506 = vtanh.pop %v452
    %v507 = vtanh.pop %v454
    %v508 = vtanh.pop %v239
    %v509 = vtanh.pop %v241
    %v510 = vtanh.pop %v312
    %v511 = vtanh.pop %v314
    %v512 = vtanh.pop %v385
    %v513 = vtanh.pop %v387
    %v514 = vtanh.pop %v458
    %v515 = vtanh.pop %v460
    %v516 = vtanh.pop %v243
    %v517 = vtanh.pop %v245
    %v518 = vtanh.pop %v316
    %v519 = vtanh.pop %v318
    %v520 = vtanh.pop %v389
    %v521 = vtanh.pop %v391
    %v522 = vtanh.pop %v462
    %v523 = vtanh.pop %v464
    %v524 = vtanh.pop %v249
    %v525 = vtanh.pop %v251
    %v526 = vtanh.pop %v322
    %v527 = vtanh.pop %v324
    %v528 = vtanh.pop %v395
    %v529 = vtanh.pop %v397
    %v530 = vtanh.pop %v468
    %v531 = vtanh.pop %v470
    %v532 = vtanh.pop %v253
    %v533 = vtanh.pop %v255
    %v534 = vtanh.pop %v326
    %v535 = vtanh.pop %v328
    %v536 = vtanh.pop %v399
    %v537 = vtanh.pop %v401
    %v538 = vtanh.pop %v472
    %v539 = vtanh.pop %v474
    %v540 = vadd.f32 %v476, 1.0
    %v541 = vadd.f32 %v477, 1.0
    %v542 = vadd.f32 %v478, 1.0
    %v543 = vadd.f32 %v479, 1.0
    %v544 = vadd.f32 %v480, 1.0
    %v545 = vadd.f32 %v481, 1.0
    %v546 = vadd.f32 %v482, 1.0
    %v547 = vadd.f32 %v483, 1.0
    %v548 = vadd.f32 %v484, 1.0
    %v549 = vadd.f32 %v485, 1.0
    %v550 = vadd.f32 %v486, 1.0
    %v551 = vadd.f32 %v487, 1.0
    %v552 = vadd.f32 %v488, 1.0
    %v553 = vadd.f32 %v489, 1.0
    %v554 = vadd.f32 %v490, 1.0
    %v555 = vadd.f32 %v491, 1.0
    %v556 = vadd.f32 %v492, 1.0
    %v557 = vadd.f32 %v493, 1.0
    %v558 = vadd.f32 %v494, 1.0
    %v559 = vadd.f32 %v495, 1.0
    %v560 = vadd.f32 %v496, 1.0
    %v561 = vadd.f32 %v497, 1.0
    %v562 = vadd.f32 %v498, 1.0
    %v563 = vadd.f32 %v499, 1.0
    %v564 = vadd.f32 %v500, 1.0
    %v565 = vadd.f32 %v501, 1.0
    %v566 = vadd.f32 %v502, 1.0
    %v567 = vadd.f32 %v503, 1.0
    %v568 = vadd.f32 %v504, 1.0
    %v569 = vadd.f32 %v505, 1.0
    %v570 = vadd.f32 %v506, 1.0
    %v571 = vadd.f32 %v507, 1.0
    %v572 = vadd.f32 %v508, 1.0
    %v573 = vadd.f32 %v509, 1.0
    %v574 = vadd.f32 %v510, 1.0
    %v575 = vadd.f32 %v511, 1.0
    %v576 = vadd.f32 %v512, 1.0
    %v577 = vadd.f32 %v513, 1.0
    %v578 = vadd.f32 %v514, 1.0
    %v579 = vadd.f32 %v515, 1.0
    %v580 = vadd.f32 %v516, 1.0
    %v581 = vadd.f32 %v517, 1.0
    %v582 = vadd.f32 %v518, 1.0
    %v583 = vadd.f32 %v519, 1.0
    %v584 = vadd.f32 %v520, 1.0
    %v585 = vadd.f32 %v521, 1.0
    %v586 = vadd.f32 %v522, 1.0
    %v587 = vadd.f32 %v523, 1.0
    %v588 = vadd.f32 %v524, 1.0
    %v589 = vadd.f32 %v525, 1.0
    %v590 = vadd.f32 %v526, 1.0
    %v591 = vadd.f32 %v527, 1.0
    %v592 = vadd.f32 %v528, 1.0
    %v593 = vadd.f32 %v529, 1.0
    %v594 = vadd.f32 %v530, 1.0
    %v595 = vadd.f32 %v531, 1.0
    %v596 = vadd.f32 %v532, 1.0
    %v597 = vadd.f32 %v533, 1.0
    %v598 = vadd.f32 %v534, 1.0
    %v599 = vadd.f32 %v535, 1.0
    %v600 = vadd.f32 %v536, 1.0
    %v601 = vadd.f32 %v537, 1.0
    %v602 = vadd.f32 %v538, 1.0
    %v603 = vadd.f32 %v539, 1.0
    %v604 = vadd.f32 %v540, %v548
    %v605 = vadd.f32 %v604, %v556
    %v606 = vadd.f32 %v605, %v564
    %v607 = vadd.f32 %v606, %v572
    %v608 = vadd.f32 %v607, %v580
    %v609 = vadd.f32 %v608, %v588
    %v610 = vadd.f32 %v609, %v596
    %v611 = vrot.slane %v610, 4
    %v612 = vadd.f32 %v610, %v611
    %v613 = vrot.slane %v612, 2
    %v614 = vadd.f32 %v612, %v613
    %v615 = vrot.slane %v614, 1
    %v616 = vadd.f32 %v614, %v615
    %v617 = vadd.f32 %v541, %v549
    %v618 = vadd.f32 %v617, %v557
    %v619 = vadd.f32 %v618, %v565
    %v620 = vadd.f32 %v619, %v573
    %v621 = vadd.f32 %v620, %v581
    %v622 = vadd.f32 %v621, %v589
    %v623 = vadd.f32 %v622, %v597
    %v624 = vrot.slane %v623, 4
    %v625 = vadd.f32 %v623, %v624
    %v626 = vrot.slane %v625, 2
    %v627 = vadd.f32 %v625, %v626
    %v628 = vrot.slane %v627, 1
    %v629 = vadd.f32 %v627, %v628
    %v630 = vadd.f32 %v542, %v550
    %v631 = vadd.f32 %v630, %v558
    %v632 = vadd.f32 %v631, %v566
    %v633 = vadd.f32 %v632, %v574
    %v634 = vadd.f32 %v633, %v582
    %v635 = vadd.f32 %v634, %v590
    %v636 = vadd.f32 %v635, %v598
    %v637 = vrot.slane %v636, 4
    %v638 = vadd.f32 %v636, %v637
    %v639 = vrot.slane %v638, 2
    %v640 = vadd.f32 %v638, %v639
    %v641 = vrot.slane %v640, 1
    %v642 = vadd.f32 %v640, %v641
    %v643 = vadd.f32 %v543, %v551
    %v644 = vadd.f32 %v643, %v559
    %v645 = vadd.f32 %v644, %v567
    %v646 = vadd.f32 %v645, %v575
    %v647 = vadd.f32 %v646, %v583
    %v648 = vadd.f32 %v647, %v591
    %v649 = vadd.f32 %v648, %v599
    %v650 = vrot.slane %v649, 4
    %v651 = vadd.f32 %v649, %v650
    %v652 = vrot.slane %v651, 2
    %v653 = vadd.f32 %v651, %v652
    %v654 = vrot.slane %v653, 1
    %v655 = vadd.f32 %v653, %v654
    %v656 = vadd.f32 %v544, %v552
    %v657 = vadd.f32 %v656, %v560
    %v658 = vadd.f32 %v657, %v568
    %v659 = vadd.f32 %v658, %v576
    %v660 = vadd.f32 %v659, %v584
    %v661 = vadd.f32 %v660, %v592
    %v662 = vadd.f32 %v661, %v600
    %v663 = vrot.slane %v662, 4
    %v664 = vadd.f32 %v662, %v663
    %v665 = vrot.slane %v664, 2
    %v666 = vadd.f32 %v664, %v665
    %v667 = vrot.slane %v666, 1
    %v668 = vadd.f32 %v666, %v667
    %v669 = vadd.f32 %v545, %v553
    %v670 = vadd.f32 %v669, %v561
    %v671 = vadd.f32 %v670, %v569
    %v672 = vadd.f32 %v671, %v577
    %v673 = vadd.f32 %v672, %v585
    %v674 = vadd.f32 %v673, %v593
    %v675 = vadd.f32 %v674, %v601
    %v676 = vrot.slane %v675, 4
    %v677 = vadd.f32 %v675, %v676
    %v678 = vrot.slane %v677, 2
    %v679 = vadd.f32 %v677, %v678
    %v680 = vrot.slane %v679, 1
    %v681 = vadd.f32 %v679, %v680
    %v682 = vadd.f32 %v546, %v554
    %v683 = vadd.f32 %v682, %v562
    %v684 = vadd.f32 %v683, %v570
    %v685 = vadd.f32 %v684, %v578
    %v686 = vadd.f32 %v685, %v586
    %v687 = vadd.f32 %v686, %v594
    %v688 = vadd.f32 %v687, %v602
    %v689 = vrot.slane %v688, 4
    %v690 = vadd.f32 %v688, %v689
    %v691 = vrot.slane %v690, 2
    %v692 = vadd.f32 %v690, %v691
    %v693 = vrot.slane %v692, 1
    %v694 = vadd.f32 %v692, %v693
    %v695 = vadd.f32 %v547, %v555
    %v696 = vadd.f32 %v695, %v563
    %v697 = vadd.f32 %v696, %v571
    %v698 = vadd.f32 %v697, %v579
    %v699 = vadd.f32 %v698, %v587
    %v700 = vadd.f32 %v699, %v595
    %v701 = vadd.f32 %v700, %v603
    %v702 = vrot.slane %v701, 4
    %v703 = vadd.f32 %v701, %v702
    %v704 = vrot.slane %v703, 2
    %v705 = vadd.f32 %v703, %v704
    %v706 = vrot.slane %v705, 1
    %v707 = vadd.f32 %v705, %v706
    %v708 = vadd.f32 %v616, 1e-15
    %v709 = vadd.f32 %v629, 1e-15
    %v710 = vadd.f32 %v642, 1e-15
    %v711 = vadd.f32 %v655, 1e-15
    %v712 = vadd.f32 %v668, 1e-15
    %v713 = vadd.f32 %v681, 1e-15
    %v714 = vadd.f32 %v694, 1e-15
    %v715 = vadd.f32 %v707, 1e-15
    %v716 = vrcp.pop %v708
    %v717 = vrcp.pop %v709
    %v718 = vrcp.pop %v710
    %v719 = vrcp.pop %v711
    %v720 = vrcp.pop %v712
    %v721 = vrcp.pop %v713
    %v722 = vrcp.pop %v714
    %v723 = vrcp.pop %v715
    %v724 = vmul.f32 %v716, 32.0
    %v725 = vmul.f32 %v717, 32.0
    %v726 = vmul.f32 %v718, 32.0
    %v727 = vmul.f32 %v719, 32.0
    %v728 = vmul.f32 %v720, 32.0
    %v729 = vmul.f32 %v721, 32.0
    %v730 = vmul.f32 %v722, 32.0
    %v731 = vmul.f32 %v723, 32.0
    %v732 = vmul.f32 %v540, %v724
    %v733 = vmul.f32 %v541, %v725
    %v734 = vmul.f32 %v542, %v726
    %v735 = vmul.f32 %v543, %v727
    %v736 = vmul.f32 %v544, %v728
    %v737 = vmul.f32 %v545, %v729
    %v738 = vmul.f32 %v546, %v730
    %v739 = vmul.f32 %v547, %v731
    %v740 = vmul.f32 %v548, %v724
    %v741 = vmul.f32 %v549, %v725
    %v742 = vmul.f32 %v550, %v726
    %v743 = vmul.f32 %v551, %v727
    %v744 = vmul.f32 %v552, %v728
    %v745 = vmul.f32 %v553, %v729
    %v746 = vmul.f32 %v554, %v730
    %v747 = vmul.f32 %v555, %v731
    %v748 = vmul.f32 %v556, %v724
    %v749 = vmul.f32 %v557, %v725
    %v750 = vmul.f32 %v558, %v726
    %v751 = vmul.f32 %v559, %v727
    %v752 = vmul.f32 %v560, %v728
    %v753 = vmul.f32 %v561, %v729
    %v754 = vmul.f32 %v562, %v730
    %v755 = vmul.f32 %v563, %v731
    %v756 = vmul.f32 %v564, %v724
    %v757 = vmul.f32 %v565, %v725
    %v758 = vmul.f32 %v566, %v726
    %v759 = vmul.f32 %v567, %v727
    %v760 = vmul.f32 %v568, %v728
    %v761 = vmul.f32 %v569, %v729
    %v762 = vmul.f32 %v570, %v730
    %v763 = vmul.f32 %v571, %v731
    %v764 = vmul.f32 %v572, %v724
    %v765 = vmul.f32 %v573, %v725
    %v766 = vmul.f32 %v574, %v726
    %v767 = vmul.f32 %v575, %v727
    %v768 = vmul.f32 %v576, %v728
    %v769 = vmul.f32 %v577, %v729
    %v770 = vmul.f32 %v578, %v730
    %v771 = vmul.f32 %v579, %v731
    %v772 = vmul.f32 %v580, %v724
    %v773 = vmul.f32 %v581, %v725
    %v774 = vmul.f32 %v582, %v726
    %v775 = vmul.f32 %v583, %v727
    %v776 = vmul.f32 %v584, %v728
    %v777 = vmul.f32 %v585, %v729
    %v778 = vmul.f32 %v586, %v730
    %v779 = vmul.f32 %v587, %v731
    %v780 = vmul.f32 %v588, %v724
    %v781 = vmul.f32 %v589, %v725
    %v782 = vmul.f32 %v590, %v726
    %v783 = vmul.f32 %v591, %v727
    %v784 = vmul.f32 %v592, %v728
    %v785 = vmul.f32 %v593, %v729
    %v786 = vmul.f32 %v594, %v730
    %v787 = vmul.f32 %v595, %v731
    %v788 = vmul.f32 %v596, %v724
    %v789 = vmul.f32 %v597, %v725
    %v790 = vmul.f32 %v598, %v726
    %v791 = vmul.f32 %v599, %v727
    %v792 = vmul.f32 %v600, %v728
    %v793 = vmul.f32 %v601, %v729
    %v794 = vmul.f32 %v602, %v730
    %v795 = vmul.f32 %v603, %v731
    %v796 = vpack.c.bf16 %v740, %v732
    %v797 = vpack.c.bf16 %v741, %v733
    %v798 = vpack.c.bf16 %v742, %v734
    %v799 = vpack.c.bf16 %v743, %v735
    %v800 = vpack.c.bf16 %v744, %v736
    %v801 = vpack.c.bf16 %v745, %v737
    %v802 = vpack.c.bf16 %v746, %v738
    %v803 = vpack.c.bf16 %v747, %v739
    %v804 = vpack.c.bf16 %v756, %v748
    %v805 = vpack.c.bf16 %v757, %v749
    %v806 = vpack.c.bf16 %v758, %v750
    %v807 = vpack.c.bf16 %v759, %v751
    %v808 = vpack.c.bf16 %v760, %v752
    %v809 = vpack.c.bf16 %v761, %v753
    %v810 = vpack.c.bf16 %v762, %v754
    %v811 = vpack.c.bf16 %v763, %v755
    %v812 = vpack.c.bf16 %v772, %v764
    %v813 = vpack.c.bf16 %v773, %v765
    %v814 = vpack.c.bf16 %v774, %v766
    %v815 = vpack.c.bf16 %v775, %v767
    %v816 = vpack.c.bf16 %v776, %v768
    %v817 = vpack.c.bf16 %v777, %v769
    %v818 = vpack.c.bf16 %v778, %v770
    %v819 = vpack.c.bf16 %v779, %v771
    %v820 = vpack.c.bf16 %v788, %v780
    %v821 = vpack.c.bf16 %v789, %v781
    %v822 = vpack.c.bf16 %v790, %v782
    %v823 = vpack.c.bf16 %v791, %v783
    %v824 = vpack.c.bf16 %v792, %v784
    %v825 = vpack.c.bf16 %v793, %v785
    %v826 = vpack.c.bf16 %v794, %v786
    %v827 = vpack.c.bf16 %v795, %v787
    %v828 = vld [vmem:[#allocation5] sm:$0xff]
    %v829 = vld [vmem:[#allocation5 + $0x8] sm:$0xff]
    %v830 = vld [vmem:[#allocation5 + $0x10] sm:$0xff]
    %v831 = vld [vmem:[#allocation5 + $0x18] sm:$0xff]
    %v832 = vld [vmem:[#allocation5 + $0x20] sm:$0xff]
    %v833 = vld [vmem:[#allocation5 + $0x28] sm:$0xff]
    %v834 = vld [vmem:[#allocation5 + $0x30] sm:$0xff]
    %v835 = vld [vmem:[#allocation5 + $0x38] sm:$0xff]
    %v836 = vld [vmem:[#allocation5 + $0x40] sm:$0xff]
    %v837 = vld [vmem:[#allocation5 + $0x48] sm:$0xff]
    %v838 = vld [vmem:[#allocation5 + $0x50] sm:$0xff]
    %v839 = vld [vmem:[#allocation5 + $0x58] sm:$0xff]
    %v840 = vld [vmem:[#allocation5 + $0x60] sm:$0xff]
    %v841 = vld [vmem:[#allocation5 + $0x68] sm:$0xff]
    %v842 = vld [vmem:[#allocation5 + $0x70] sm:$0xff]
    %v843 = vld [vmem:[#allocation5 + $0x78] sm:$0xff]
    %v844 = vld [vmem:[#allocation5 + $0x80] sm:$0xff]
    %v845 = vld [vmem:[#allocation5 + $0x88] sm:$0xff]
    %v846 = vld [vmem:[#allocation5 + $0x90] sm:$0xff]
    %v847 = vld [vmem:[#allocation5 + $0x98] sm:$0xff]
    %v848 = vld [vmem:[#allocation5 + $0xa0] sm:$0xff]
    %v849 = vld [vmem:[#allocation5 + $0xa8] sm:$0xff]
    %v850 = vld [vmem:[#allocation5 + $0xb0] sm:$0xff]
    %v851 = vld [vmem:[#allocation5 + $0xb8] sm:$0xff]
    %v852 = vld [vmem:[#allocation5 + $0xc0] sm:$0xff]
    %v853 = vld [vmem:[#allocation5 + $0xc8] sm:$0xff]
    %v854 = vld [vmem:[#allocation5 + $0xd0] sm:$0xff]
    %v855 = vld [vmem:[#allocation5 + $0xd8] sm:$0xff]
    %v856 = vld [vmem:[#allocation5 + $0xe0] sm:$0xff]
    %v857 = vld [vmem:[#allocation5 + $0xe8] sm:$0xff]
    %v858 = vld [vmem:[#allocation5 + $0xf0] sm:$0xff]
    %v859 = vld [vmem:[#allocation5 + $0xf8] sm:$0xff]
    %v860 = vld [vmem:[#allocation5 + $0x100] sm:$0xff]
    %v861 = vld [vmem:[#allocation5 + $0x108] sm:$0xff]
    %v862 = vld [vmem:[#allocation5 + $0x110] sm:$0xff]
    %v863 = vld [vmem:[#allocation5 + $0x118] sm:$0xff]
    %v864 = vld [vmem:[#allocation5 + $0x120] sm:$0xff]
    %v865 = vld [vmem:[#allocation5 + $0x128] sm:$0xff]
    %v866 = vld [vmem:[#allocation5 + $0x130] sm:$0xff]
    %v867 = vld [vmem:[#allocation5 + $0x138] sm:$0xff]
    %v868 = vld [vmem:[#allocation5 + $0x140] sm:$0xff]
    %v869 = vld [vmem:[#allocation5 + $0x148] sm:$0xff]
    %v870 = vld [vmem:[#allocation5 + $0x150] sm:$0xff]
    %v871 = vld [vmem:[#allocation5 + $0x158] sm:$0xff]
    %v872 = vld [vmem:[#allocation5 + $0x160] sm:$0xff]
    %v873 = vld [vmem:[#allocation5 + $0x168] sm:$0xff]
    %v874 = vld [vmem:[#allocation5 + $0x170] sm:$0xff]
    %v875 = vld [vmem:[#allocation5 + $0x178] sm:$0xff]
    %v876 = vld [vmem:[#allocation5 + $0x180] sm:$0xff]
    %v877 = vld [vmem:[#allocation5 + $0x188] sm:$0xff]
    %v878 = vld [vmem:[#allocation5 + $0x190] sm:$0xff]
    %v879 = vld [vmem:[#allocation5 + $0x198] sm:$0xff]
    %v880 = vld [vmem:[#allocation5 + $0x1a0] sm:$0xff]
    %v881 = vld [vmem:[#allocation5 + $0x1a8] sm:$0xff]
    %v882 = vld [vmem:[#allocation5 + $0x1b0] sm:$0xff]
    %v883 = vld [vmem:[#allocation5 + $0x1b8] sm:$0xff]
    %v884 = vld [vmem:[#allocation5 + $0x1c0] sm:$0xff]
    %v885 = vld [vmem:[#allocation5 + $0x1c8] sm:$0xff]
    %v886 = vld [vmem:[#allocation5 + $0x1d0] sm:$0xff]
    %v887 = vld [vmem:[#allocation5 + $0x1d8] sm:$0xff]
    %v888 = vld [vmem:[#allocation5 + $0x1e0] sm:$0xff]
    %v889 = vld [vmem:[#allocation5 + $0x1e8] sm:$0xff]
    %v890 = vld [vmem:[#allocation5 + $0x1f0] sm:$0xff]
    %v891 = vld [vmem:[#allocation5 + $0x1f8] sm:$0xff]
    %v892 = vld [vmem:[#allocation5 + $0x200] sm:$0xff]
    %v893 = vld [vmem:[#allocation5 + $0x208] sm:$0xff]
    %v894 = vld [vmem:[#allocation5 + $0x210] sm:$0xff]
    %v895 = vld [vmem:[#allocation5 + $0x218] sm:$0xff]
    %v896 = vld [vmem:[#allocation5 + $0x220] sm:$0xff]
    %v897 = vld [vmem:[#allocation5 + $0x228] sm:$0xff]
    %v898 = vld [vmem:[#allocation5 + $0x230] sm:$0xff]
    %v899 = vld [vmem:[#allocation5 + $0x238] sm:$0xff]
    %v900 = vld [vmem:[#allocation5 + $0x240] sm:$0xff]
    %v901 = vld [vmem:[#allocation5 + $0x248] sm:$0xff]
    %v902 = vld [vmem:[#allocation5 + $0x250] sm:$0xff]
    %v903 = vld [vmem:[#allocation5 + $0x258] sm:$0xff]
    %v904 = vld [vmem:[#allocation5 + $0x260] sm:$0xff]
    %v905 = vld [vmem:[#allocation5 + $0x268] sm:$0xff]
    %v906 = vld [vmem:[#allocation5 + $0x270] sm:$0xff]
    %v907 = vld [vmem:[#allocation5 + $0x278] sm:$0xff]
    %v908 = vld [vmem:[#allocation5 + $0x280] sm:$0xff]
    %v909 = vld [vmem:[#allocation5 + $0x288] sm:$0xff]
    %v910 = vld [vmem:[#allocation5 + $0x290] sm:$0xff]
    %v911 = vld [vmem:[#allocation5 + $0x298] sm:$0xff]
    %v912 = vld [vmem:[#allocation5 + $0x2a0] sm:$0xff]
    %v913 = vld [vmem:[#allocation5 + $0x2a8] sm:$0xff]
    %v914 = vld [vmem:[#allocation5 + $0x2b0] sm:$0xff]
    %v915 = vld [vmem:[#allocation5 + $0x2b8] sm:$0xff]
    %v916 = vld [vmem:[#allocation5 + $0x2c0] sm:$0xff]
    %v917 = vld [vmem:[#allocation5 + $0x2c8] sm:$0xff]
    %v918 = vld [vmem:[#allocation5 + $0x2d0] sm:$0xff]
    %v919 = vld [vmem:[#allocation5 + $0x2d8] sm:$0xff]
    %v920 = vld [vmem:[#allocation5 + $0x2e0] sm:$0xff]
    %v921 = vld [vmem:[#allocation5 + $0x2e8] sm:$0xff]
    %v922 = vld [vmem:[#allocation5 + $0x2f0] sm:$0xff]
    %v923 = vld [vmem:[#allocation5 + $0x2f8] sm:$0xff]
    %v924 = vld [vmem:[#allocation5 + $0x300] sm:$0xff]
    %v925 = vld [vmem:[#allocation5 + $0x308] sm:$0xff]
    %v926 = vld [vmem:[#allocation5 + $0x310] sm:$0xff]
    %v927 = vld [vmem:[#allocation5 + $0x318] sm:$0xff]
    %v928 = vld [vmem:[#allocation5 + $0x320] sm:$0xff]
    %v929 = vld [vmem:[#allocation5 + $0x328] sm:$0xff]
    %v930 = vld [vmem:[#allocation5 + $0x330] sm:$0xff]
    %v931 = vld [vmem:[#allocation5 + $0x338] sm:$0xff]
    %v932 = vld [vmem:[#allocation5 + $0x340] sm:$0xff]
    %v933 = vld [vmem:[#allocation5 + $0x348] sm:$0xff]
    %v934 = vld [vmem:[#allocation5 + $0x350] sm:$0xff]
    %v935 = vld [vmem:[#allocation5 + $0x358] sm:$0xff]
    %v936 = vld [vmem:[#allocation5 + $0x360] sm:$0xff]
    %v937 = vld [vmem:[#allocation5 + $0x368] sm:$0xff]
    %v938 = vld [vmem:[#allocation5 + $0x370] sm:$0xff]
    %v939 = vld [vmem:[#allocation5 + $0x378] sm:$0xff]
    %v940 = vld [vmem:[#allocation5 + $0x380] sm:$0xff]
    %v941 = vld [vmem:[#allocation5 + $0x388] sm:$0xff]
    %v942 = vld [vmem:[#allocation5 + $0x390] sm:$0xff]
    %v943 = vld [vmem:[#allocation5 + $0x398] sm:$0xff]
    %v944 = vld [vmem:[#allocation5 + $0x3a0] sm:$0xff]
    %v945 = vld [vmem:[#allocation5 + $0x3a8] sm:$0xff]
    %v946 = vld [vmem:[#allocation5 + $0x3b0] sm:$0xff]
    %v947 = vld [vmem:[#allocation5 + $0x3b8] sm:$0xff]
    %v948 = vld [vmem:[#allocation5 + $0x3c0] sm:$0xff]
    %v949 = vld [vmem:[#allocation5 + $0x3c8] sm:$0xff]
    %v950 = vld [vmem:[#allocation5 + $0x3d0] sm:$0xff]
    %v951 = vld [vmem:[#allocation5 + $0x3d8] sm:$0xff]
    %v952 = vld [vmem:[#allocation5 + $0x3e0] sm:$0xff]
    %v953 = vld [vmem:[#allocation5 + $0x3e8] sm:$0xff]
    %v954 = vld [vmem:[#allocation5 + $0x3f0] sm:$0xff]
    %v955 = vld [vmem:[#allocation5 + $0x3f8] sm:$0xff]
    %v1084 = vunpack.c.l.b16 %v828
    %v1085 = vunpack.c.h.b16 %v828
    %v1086 = vunpack.c.l.b16 %v829
    %v1087 = vunpack.c.h.b16 %v829
    %v1088 = vunpack.c.l.b16 %v830
    %v1089 = vunpack.c.h.b16 %v830
    %v1090 = vunpack.c.l.b16 %v831
    %v1091 = vunpack.c.h.b16 %v831
    %v1092 = vunpack.c.l.b16 %v832
    %v1093 = vunpack.c.h.b16 %v832
    %v1094 = vunpack.c.l.b16 %v833
    %v1095 = vunpack.c.h.b16 %v833
    %v1096 = vunpack.c.l.b16 %v834
    %v1097 = vunpack.c.h.b16 %v834
    %v1098 = vunpack.c.l.b16 %v835
    %v1099 = vunpack.c.h.b16 %v835
    %v1100 = vunpack.c.l.b16 %v836
    %v1101 = vunpack.c.h.b16 %v836
    %v1102 = vunpack.c.l.b16 %v837
    %v1103 = vunpack.c.h.b16 %v837
    %v1104 = vunpack.c.l.b16 %v838
    %v1105 = vunpack.c.h.b16 %v838
    %v1106 = vunpack.c.l.b16 %v839
    %v1107 = vunpack.c.h.b16 %v839
    %v1108 = vunpack.c.l.b16 %v840
    %v1109 = vunpack.c.h.b16 %v840
    %v1110 = vunpack.c.l.b16 %v841
    %v1111 = vunpack.c.h.b16 %v841
    %v1112 = vunpack.c.l.b16 %v842
    %v1113 = vunpack.c.h.b16 %v842
    %v1114 = vunpack.c.l.b16 %v843
    %v1115 = vunpack.c.h.b16 %v843
    %v1116 = vunpack.c.l.b16 %v844
    %v1117 = vunpack.c.h.b16 %v844
    %v1118 = vunpack.c.l.b16 %v845
    %v1119 = vunpack.c.h.b16 %v845
    %v1120 = vunpack.c.l.b16 %v846
    %v1121 = vunpack.c.h.b16 %v846
    %v1122 = vunpack.c.l.b16 %v847
    %v1123 = vunpack.c.h.b16 %v847
    %v1124 = vunpack.c.l.b16 %v848
    %v1125 = vunpack.c.h.b16 %v848
    %v1126 = vunpack.c.l.b16 %v849
    %v1127 = vunpack.c.h.b16 %v849
    %v1128 = vunpack.c.l.b16 %v850
    %v1129 = vunpack.c.h.b16 %v850
    %v1130 = vunpack.c.l.b16 %v851
    %v1131 = vunpack.c.h.b16 %v851
    %v1132 = vunpack.c.l.b16 %v852
    %v1133 = vunpack.c.h.b16 %v852
    %v1134 = vunpack.c.l.b16 %v853
    %v1135 = vunpack.c.h.b16 %v853
    %v1136 = vunpack.c.l.b16 %v854
    %v1137 = vunpack.c.h.b16 %v854
    %v1138 = vunpack.c.l.b16 %v855
    %v1139 = vunpack.c.h.b16 %v855
    %v1140 = vunpack.c.l.b16 %v856
    %v1141 = vunpack.c.h.b16 %v856
    %v1142 = vunpack.c.l.b16 %v857
    %v1143 = vunpack.c.h.b16 %v857
    %v1144 = vunpack.c.l.b16 %v858
    %v1145 = vunpack.c.h.b16 %v858
    %v1146 = vunpack.c.l.b16 %v859
    %v1147 = vunpack.c.h.b16 %v859
    %v1148 = vunpack.c.l.b16 %v860
    %v1149 = vunpack.c.h.b16 %v860
    %v1150 = vunpack.c.l.b16 %v861
    %v1151 = vunpack.c.h.b16 %v861
    %v1152 = vunpack.c.l.b16 %v862
    %v1153 = vunpack.c.h.b16 %v862
    %v1154 = vunpack.c.l.b16 %v863
    %v1155 = vunpack.c.h.b16 %v863
    %v1156 = vunpack.c.l.b16 %v864
    %v1157 = vunpack.c.h.b16 %v864
    %v1158 = vunpack.c.l.b16 %v865
    %v1159 = vunpack.c.h.b16 %v865
    %v1160 = vunpack.c.l.b16 %v866
    %v1161 = vunpack.c.h.b16 %v866
    %v1162 = vunpack.c.l.b16 %v867
    %v1163 = vunpack.c.h.b16 %v867
    %v1164 = vunpack.c.l.b16 %v868
    %v1165 = vunpack.c.h.b16 %v868
    %v1166 = vunpack.c.l.b16 %v869
    %v1167 = vunpack.c.h.b16 %v869
    %v1168 = vunpack.c.l.b16 %v870
    %v1169 = vunpack.c.h.b16 %v870
    %v1170 = vunpack.c.l.b16 %v871
    %v1171 = vunpack.c.h.b16 %v871
    %v1172 = vunpack.c.l.b16 %v872
    %v1173 = vunpack.c.h.b16 %v872
    %v1174 = vunpack.c.l.b16 %v873
    %v1175 = vunpack.c.h.b16 %v873
    %v1176 = vunpack.c.l.b16 %v874
    %v1177 = vunpack.c.h.b16 %v874
    %v1178 = vunpack.c.l.b16 %v875
    %v1179 = vunpack.c.h.b16 %v875
    %v1180 = vunpack.c.l.b16 %v876
    %v1181 = vunpack.c.h.b16 %v876
    %v1182 = vunpack.c.l.b16 %v877
    %v1183 = vunpack.c.h.b16 %v877
    %v1184 = vunpack.c.l.b16 %v878
    %v1185 = vunpack.c.h.b16 %v878
    %v1186 = vunpack.c.l.b16 %v879
    %v1187 = vunpack.c.h.b16 %v879
    %v1188 = vunpack.c.l.b16 %v880
    %v1189 = vunpack.c.h.b16 %v880
    %v1190 = vunpack.c.l.b16 %v881
    %v1191 = vunpack.c.h.b16 %v881
    %v1192 = vunpack.c.l.b16 %v882
    %v1193 = vunpack.c.h.b16 %v882
    %v1194 = vunpack.c.l.b16 %v883
    %v1195 = vunpack.c.h.b16 %v883
    %v1196 = vunpack.c.l.b16 %v884
    %v1197 = vunpack.c.h.b16 %v884
    %v1198 = vunpack.c.l.b16 %v885
    %v1199 = vunpack.c.h.b16 %v885
    %v1200 = vunpack.c.l.b16 %v886
    %v1201 = vunpack.c.h.b16 %v886
    %v1202 = vunpack.c.l.b16 %v887
    %v1203 = vunpack.c.h.b16 %v887
    %v1204 = vunpack.c.l.b16 %v888
    %v1205 = vunpack.c.h.b16 %v888
    %v1206 = vunpack.c.l.b16 %v889
    %v1207 = vunpack.c.h.b16 %v889
    %v1208 = vunpack.c.l.b16 %v890
    %v1209 = vunpack.c.h.b16 %v890
    %v1210 = vunpack.c.l.b16 %v891
    %v1211 = vunpack.c.h.b16 %v891
    %v1212 = vunpack.c.l.b16 %v892
    %v1213 = vunpack.c.h.b16 %v892
    %v1214 = vunpack.c.l.b16 %v893
    %v1215 = vunpack.c.h.b16 %v893
    %v1216 = vunpack.c.l.b16 %v894
    %v1217 = vunpack.c.h.b16 %v894
    %v1218 = vunpack.c.l.b16 %v895
    %v1219 = vunpack.c.h.b16 %v895
    %v1220 = vunpack.c.l.b16 %v896
    %v1221 = vunpack.c.h.b16 %v896
    %v1222 = vunpack.c.l.b16 %v897
    %v1223 = vunpack.c.h.b16 %v897
    %v1224 = vunpack.c.l.b16 %v898
    %v1225 = vunpack.c.h.b16 %v898
    %v1226 = vunpack.c.l.b16 %v899
    %v1227 = vunpack.c.h.b16 %v899
    %v1228 = vunpack.c.l.b16 %v900
    %v1229 = vunpack.c.h.b16 %v900
    %v1230 = vunpack.c.l.b16 %v901
    %v1231 = vunpack.c.h.b16 %v901
    %v1232 = vunpack.c.l.b16 %v902
    %v1233 = vunpack.c.h.b16 %v902
    %v1234 = vunpack.c.l.b16 %v903
    %v1235 = vunpack.c.h.b16 %v903
    %v1236 = vunpack.c.l.b16 %v904
    %v1237 = vunpack.c.h.b16 %v904
    %v1238 = vunpack.c.l.b16 %v905
    %v1239 = vunpack.c.h.b16 %v905
    %v1240 = vunpack.c.l.b16 %v906
    %v1241 = vunpack.c.h.b16 %v906
    %v1242 = vunpack.c.l.b16 %v907
    %v1243 = vunpack.c.h.b16 %v907
    %v1244 = vunpack.c.l.b16 %v908
    %v1245 = vunpack.c.h.b16 %v908
    %v1246 = vunpack.c.l.b16 %v909
    %v1247 = vunpack.c.h.b16 %v909
    %v1248 = vunpack.c.l.b16 %v910
    %v1249 = vunpack.c.h.b16 %v910
    %v1250 = vunpack.c.l.b16 %v911
    %v1251 = vunpack.c.h.b16 %v911
    %v1252 = vunpack.c.l.b16 %v912
    %v1253 = vunpack.c.h.b16 %v912
    %v1254 = vunpack.c.l.b16 %v913
    %v1255 = vunpack.c.h.b16 %v913
    %v1256 = vunpack.c.l.b16 %v914
    %v1257 = vunpack.c.h.b16 %v914
    %v1258 = vunpack.c.l.b16 %v915
    %v1259 = vunpack.c.h.b16 %v915
    %v1260 = vunpack.c.l.b16 %v916
    %v1261 = vunpack.c.h.b16 %v916
    %v1262 = vunpack.c.l.b16 %v917
    %v1263 = vunpack.c.h.b16 %v917
    %v1264 = vunpack.c.l.b16 %v918
    %v1265 = vunpack.c.h.b16 %v918
    %v1266 = vunpack.c.l.b16 %v919
    %v1267 = vunpack.c.h.b16 %v919
    %v1268 = vunpack.c.l.b16 %v920
    %v1269 = vunpack.c.h.b16 %v920
    %v1270 = vunpack.c.l.b16 %v921
    %v1271 = vunpack.c.h.b16 %v921
    %v1272 = vunpack.c.l.b16 %v922
    %v1273 = vunpack.c.h.b16 %v922
    %v1274 = vunpack.c.l.b16 %v923
    %v1275 = vunpack.c.h.b16 %v923
    %v1276 = vunpack.c.l.b16 %v924
    %v1277 = vunpack.c.h.b16 %v924
    %v1278 = vunpack.c.l.b16 %v925
    %v1279 = vunpack.c.h.b16 %v925
    %v1280 = vunpack.c.l.b16 %v926
    %v1281 = vunpack.c.h.b16 %v926
    %v1282 = vunpack.c.l.b16 %v927
    %v1283 = vunpack.c.h.b16 %v927
    %v1284 = vunpack.c.l.b16 %v928
    %v1285 = vunpack.c.h.b16 %v928
    %v1286 = vunpack.c.l.b16 %v929
    %v1287 = vunpack.c.h.b16 %v929
    %v1288 = vunpack.c.l.b16 %v930
    %v1289 = vunpack.c.h.b16 %v930
    %v1290 = vunpack.c.l.b16 %v931
    %v1291 = vunpack.c.h.b16 %v931
    %v1292 = vunpack.c.l.b16 %v932
    %v1293 = vunpack.c.h.b16 %v932
    %v1294 = vunpack.c.l.b16 %v933
    %v1295 = vunpack.c.h.b16 %v933
    %v1296 = vunpack.c.l.b16 %v934
    %v1297 = vunpack.c.h.b16 %v934
    %v1298 = vunpack.c.l.b16 %v935
    %v1299 = vunpack.c.h.b16 %v935
    %v1300 = vunpack.c.l.b16 %v936
    %v1301 = vunpack.c.h.b16 %v936
    %v1302 = vunpack.c.l.b16 %v937
    %v1303 = vunpack.c.h.b16 %v937
    %v1304 = vunpack.c.l.b16 %v938
    %v1305 = vunpack.c.h.b16 %v938
    %v1306 = vunpack.c.l.b16 %v939
    %v1307 = vunpack.c.h.b16 %v939
    %v1308 = vunpack.c.l.b16 %v940
    %v1309 = vunpack.c.h.b16 %v940
    %v1310 = vunpack.c.l.b16 %v941
    %v1311 = vunpack.c.h.b16 %v941
    %v1312 = vunpack.c.l.b16 %v942
    %v1313 = vunpack.c.h.b16 %v942
    %v1314 = vunpack.c.l.b16 %v943
    %v1315 = vunpack.c.h.b16 %v943
    %v1316 = vunpack.c.l.b16 %v944
    %v1317 = vunpack.c.h.b16 %v944
    %v1318 = vunpack.c.l.b16 %v945
    %v1319 = vunpack.c.h.b16 %v945
    %v1320 = vunpack.c.l.b16 %v946
    %v1321 = vunpack.c.h.b16 %v946
    %v1322 = vunpack.c.l.b16 %v947
    %v1323 = vunpack.c.h.b16 %v947
    %v1324 = vunpack.c.l.b16 %v948
    %v1325 = vunpack.c.h.b16 %v948
    %v1326 = vunpack.c.l.b16 %v949
    %v1327 = vunpack.c.h.b16 %v949
    %v1328 = vunpack.c.l.b16 %v950
    %v1329 = vunpack.c.h.b16 %v950
    %v1330 = vunpack.c.l.b16 %v951
    %v1331 = vunpack.c.h.b16 %v951
    %v1332 = vunpack.c.l.b16 %v952
    %v1333 = vunpack.c.h.b16 %v952
    %v1334 = vunpack.c.l.b16 %v953
    %v1335 = vunpack.c.h.b16 %v953
    %v1336 = vunpack.c.l.b16 %v954
    %v1337 = vunpack.c.h.b16 %v954
    %v1338 = vunpack.c.l.b16 %v955
    %v1339 = vunpack.c.h.b16 %v955
    %v1340 = vpack.c.b16 %v1086, %v1084
    %v1341 = vpack.c.b16 %v1087, %v1085
    %v1342 = vpack.c.b16 %v1090, %v1088
    %v1343 = vpack.c.b16 %v1091, %v1089
    %v1344 = vpack.c.b16 %v1094, %v1092
    %v1345 = vpack.c.b16 %v1095, %v1093
    %v1346 = vpack.c.b16 %v1098, %v1096
    %v1347 = vpack.c.b16 %v1099, %v1097
    %v1348 = vpack.c.b16 %v1102, %v1100
    %v1349 = vpack.c.b16 %v1103, %v1101
    %v1350 = vpack.c.b16 %v1106, %v1104
    %v1351 = vpack.c.b16 %v1107, %v1105
    %v1352 = vpack.c.b16 %v1110, %v1108
    %v1353 = vpack.c.b16 %v1111, %v1109
    %v1354 = vpack.c.b16 %v1114, %v1112
    %v1355 = vpack.c.b16 %v1115, %v1113
    %v1356 = vpack.c.b16 %v1118, %v1116
    %v1357 = vpack.c.b16 %v1119, %v1117
    %v1358 = vpack.c.b16 %v1122, %v1120
    %v1359 = vpack.c.b16 %v1123, %v1121
    %v1360 = vpack.c.b16 %v1126, %v1124
    %v1361 = vpack.c.b16 %v1127, %v1125
    %v1362 = vpack.c.b16 %v1130, %v1128
    %v1363 = vpack.c.b16 %v1131, %v1129
    %v1364 = vpack.c.b16 %v1134, %v1132
    %v1365 = vpack.c.b16 %v1135, %v1133
    %v1366 = vpack.c.b16 %v1138, %v1136
    %v1367 = vpack.c.b16 %v1139, %v1137
    %v1368 = vpack.c.b16 %v1142, %v1140
    %v1369 = vpack.c.b16 %v1143, %v1141
    %v1370 = vpack.c.b16 %v1146, %v1144
    %v1371 = vpack.c.b16 %v1147, %v1145
    %v1372 = vpack.c.b16 %v1150, %v1148
    %v1373 = vpack.c.b16 %v1151, %v1149
    %v1374 = vpack.c.b16 %v1154, %v1152
    %v1375 = vpack.c.b16 %v1155, %v1153
    %v1376 = vpack.c.b16 %v1158, %v1156
    %v1377 = vpack.c.b16 %v1159, %v1157
    %v1378 = vpack.c.b16 %v1162, %v1160
    %v1379 = vpack.c.b16 %v1163, %v1161
    %v1380 = vpack.c.b16 %v1166, %v1164
    %v1381 = vpack.c.b16 %v1167, %v1165
    %v1382 = vpack.c.b16 %v1170, %v1168
    %v1383 = vpack.c.b16 %v1171, %v1169
    %v1384 = vpack.c.b16 %v1174, %v1172
    %v1385 = vpack.c.b16 %v1175, %v1173
    %v1386 = vpack.c.b16 %v1178, %v1176
    %v1387 = vpack.c.b16 %v1179, %v1177
    %v1388 = vpack.c.b16 %v1182, %v1180
    %v1389 = vpack.c.b16 %v1183, %v1181
    %v1390 = vpack.c.b16 %v1186, %v1184
    %v1391 = vpack.c.b16 %v1187, %v1185
    %v1392 = vpack.c.b16 %v1190, %v1188
    %v1393 = vpack.c.b16 %v1191, %v1189
    %v1394 = vpack.c.b16 %v1194, %v1192
    %v1395 = vpack.c.b16 %v1195, %v1193
    %v1396 = vpack.c.b16 %v1198, %v1196
    %v1397 = vpack.c.b16 %v1199, %v1197
    %v1398 = vpack.c.b16 %v1202, %v1200
    %v1399 = vpack.c.b16 %v1203, %v1201
    %v1400 = vpack.c.b16 %v1206, %v1204
    %v1401 = vpack.c.b16 %v1207, %v1205
    %v1402 = vpack.c.b16 %v1210, %v1208
    %v1403 = vpack.c.b16 %v1211, %v1209
    %v1404 = vpack.c.b16 %v1214, %v1212
    %v1405 = vpack.c.b16 %v1215, %v1213
    %v1406 = vpack.c.b16 %v1218, %v1216
    %v1407 = vpack.c.b16 %v1219, %v1217
    %v1408 = vpack.c.b16 %v1222, %v1220
    %v1409 = vpack.c.b16 %v1223, %v1221
    %v1410 = vpack.c.b16 %v1226, %v1224
    %v1411 = vpack.c.b16 %v1227, %v1225
    %v1412 = vpack.c.b16 %v1230, %v1228
    %v1413 = vpack.c.b16 %v1231, %v1229
    %v1414 = vpack.c.b16 %v1234, %v1232
    %v1415 = vpack.c.b16 %v1235, %v1233
    %v1416 = vpack.c.b16 %v1238, %v1236
    %v1417 = vpack.c.b16 %v1239, %v1237
    %v1418 = vpack.c.b16 %v1242, %v1240
    %v1419 = vpack.c.b16 %v1243, %v1241
    %v1420 = vpack.c.b16 %v1246, %v1244
    %v1421 = vpack.c.b16 %v1247, %v1245
    %v1422 = vpack.c.b16 %v1250, %v1248
    %v1423 = vpack.c.b16 %v1251, %v1249
    %v1424 = vpack.c.b16 %v1254, %v1252
    %v1425 = vpack.c.b16 %v1255, %v1253
    %v1426 = vpack.c.b16 %v1258, %v1256
    %v1427 = vpack.c.b16 %v1259, %v1257
    %v1428 = vpack.c.b16 %v1262, %v1260
    %v1429 = vpack.c.b16 %v1263, %v1261
    %v1430 = vpack.c.b16 %v1266, %v1264
    %v1431 = vpack.c.b16 %v1267, %v1265
    %v1432 = vpack.c.b16 %v1270, %v1268
    %v1433 = vpack.c.b16 %v1271, %v1269
    %v1434 = vpack.c.b16 %v1274, %v1272
    %v1435 = vpack.c.b16 %v1275, %v1273
    %v1436 = vpack.c.b16 %v1278, %v1276
    %v1437 = vpack.c.b16 %v1279, %v1277
    %v1438 = vpack.c.b16 %v1282, %v1280
    %v1439 = vpack.c.b16 %v1283, %v1281
    %v1440 = vpack.c.b16 %v1286, %v1284
    %v1441 = vpack.c.b16 %v1287, %v1285
    %v1442 = vpack.c.b16 %v1290, %v1288
    %v1443 = vpack.c.b16 %v1291, %v1289
    %v1444 = vpack.c.b16 %v1294, %v1292
    %v1445 = vpack.c.b16 %v1295, %v1293
    %v1446 = vpack.c.b16 %v1298, %v1296
    %v1447 = vpack.c.b16 %v1299, %v1297
    %v1448 = vpack.c.b16 %v1302, %v1300
    %v1449 = vpack.c.b16 %v1303, %v1301
    %v1450 = vpack.c.b16 %v1306, %v1304
    %v1451 = vpack.c.b16 %v1307, %v1305
    %v1452 = vpack.c.b16 %v1310, %v1308
    %v1453 = vpack.c.b16 %v1311, %v1309
    %v1454 = vpack.c.b16 %v1314, %v1312
    %v1455 = vpack.c.b16 %v1315, %v1313
    %v1456 = vpack.c.b16 %v1318, %v1316
    %v1457 = vpack.c.b16 %v1319, %v1317
    %v1458 = vpack.c.b16 %v1322, %v1320
    %v1459 = vpack.c.b16 %v1323, %v1321
    %v1460 = vpack.c.b16 %v1326, %v1324
    %v1461 = vpack.c.b16 %v1327, %v1325
    %v1462 = vpack.c.b16 %v1330, %v1328
    %v1463 = vpack.c.b16 %v1331, %v1329
    %v1464 = vpack.c.b16 %v1334, %v1332
    %v1465 = vpack.c.b16 %v1335, %v1333
    %v1466 = vpack.c.b16 %v1338, %v1336
    %v1467 = vpack.c.b16 %v1339, %v1337
    %1596 = vmatprep.subr.bf16.mxu0 %v1355
    %1597 = vmatpush1.bf16.msra.mxu0 %v1354
    %1598 = vmatprep.subr.bf16.mxu0 %v1353
    %1599 = vmatpush1.bf16.msra.mxu0 %v1352
    %1600 = vmatprep.subr.bf16.mxu0 %v1351
    %1601 = vmatpush1.bf16.msra.mxu0 %v1350
    %1602 = vmatprep.subr.bf16.mxu0 %v1349
    %1603 = vmatpush1.bf16.msra.mxu0 %v1348
    %1604 = vmatprep.subr.bf16.mxu0 %v1347
    %1605 = vmatpush1.bf16.msra.mxu0 %v1346
    %1606 = vmatprep.subr.bf16.mxu0 %v1345
    %1607 = vmatpush1.bf16.msra.mxu0 %v1344
    %1608 = vmatprep.subr.bf16.mxu0 %v1343
    %1609 = vmatpush1.bf16.msra.mxu0 %v1342
    %1610 = vmatprep.subr.bf16.mxu0 %v1341
    %1611 = vmatpush1.bf16.msra.mxu0 %v1340
    %1612 = vmatprep.subr.bf16.mxu0 %v1371
    %1613 = vmatpush2.bf16.msra.mxu0 %v1370
    %1614 = vmatprep.subr.bf16.mxu0 %v1369
    %1615 = vmatpush2.bf16.msra.mxu0 %v1368
    %1616 = vmatprep.subr.bf16.mxu0 %v1367
    %1617 = vmatpush2.bf16.msra.mxu0 %v1366
    %1618 = vmatprep.subr.bf16.mxu0 %v1365
    %1619 = vmatpush2.bf16.msra.mxu0 %v1364
    %1620 = vmatprep.subr.bf16.mxu0 %v1363
    %1621 = vmatpush2.bf16.msra.mxu0 %v1362
    %1622 = vmatprep.subr.bf16.mxu0 %v1361
    %1623 = vmatpush2.bf16.msra.mxu0 %v1360
    %1624 = vmatprep.subr.bf16.mxu0 %v1359
    %1625 = vmatpush2.bf16.msra.mxu0 %v1358
    %1626 = vmatprep.subr.bf16.mxu0 %v1357
    %1627 = vmatpush2.bf16.msra.mxu0 %v1356
    %1628 = vmatprep.mubr.bf16.mxu0 %v797
    %1629 = vmatmul.mubr.bf16.gmra.mxu0 %v796
    %v1630 = vpop.f32.mrf.mxu0
    %v1631 = vadd.f32 0.0, %v1630
    %v1632 = vpop.f32.mrf.mxu0
    %v1633 = vadd.f32 0.0, %v1632
    %v1634 = vpop.f32.mrf.mxu0
    %v1635 = vadd.f32 0.0, %v1634
    %v1636 = vpop.f32.mrf.mxu0
    %v1637 = vadd.f32 0.0, %v1636
    %1638 = vmatprep.mubr.bf16.mxu0 %v805
    %1639 = vmatmul.mubr.bf16.gmra.mxu0 %v804
    %v1640 = vpop.f32.mrf.mxu0
    %v1641 = vadd.f32 0.0, %v1640
    %v1642 = vpop.f32.mrf.mxu0
    %v1643 = vadd.f32 0.0, %v1642
    %v1644 = vpop.f32.mrf.mxu0
    %v1645 = vadd.f32 0.0, %v1644
    %v1646 = vpop.f32.mrf.mxu0
    %v1647 = vadd.f32 0.0, %v1646
    %1648 = vmatprep.mubr.bf16.mxu0 %v813
    %1649 = vmatmul.mubr.bf16.gmra.mxu0 %v812
    %v1650 = vpop.f32.mrf.mxu0
    %v1651 = vadd.f32 0.0, %v1650
    %v1652 = vpop.f32.mrf.mxu0
    %v1653 = vadd.f32 0.0, %v1652
    %v1654 = vpop.f32.mrf.mxu0
    %v1655 = vadd.f32 0.0, %v1654
    %v1656 = vpop.f32.mrf.mxu0
    %v1657 = vadd.f32 0.0, %v1656
    %1658 = vmatprep.mubr.bf16.mxu0 %v821
    %1659 = vmatmul.mubr.bf16.gmra.mxu0 %v820
    %v1660 = vpop.f32.mrf.mxu0
    %v1661 = vadd.f32 0.0, %v1660
    %v1662 = vpop.f32.mrf.mxu0
    %v1663 = vadd.f32 0.0, %v1662
    %v1664 = vpop.f32.mrf.mxu0
    %v1665 = vadd.f32 0.0, %v1664
    %v1666 = vpop.f32.mrf.mxu0
    %v1667 = vadd.f32 0.0, %v1666
    %1668 = vdwg.mxu0
    %1669 = vmatprep.subr.bf16.mxu0 %v1387
    %1670 = vmatpush1.bf16.msra.mxu0 %v1386
    %1671 = vmatprep.subr.bf16.mxu0 %v1385
    %1672 = vmatpush1.bf16.msra.mxu0 %v1384
    %1673 = vmatprep.subr.bf16.mxu0 %v1383
    %1674 = vmatpush1.bf16.msra.mxu0 %v1382
    %1675 = vmatprep.subr.bf16.mxu0 %v1381
    %1676 = vmatpush1.bf16.msra.mxu0 %v1380
    %1677 = vmatprep.subr.bf16.mxu0 %v1379
    %1678 = vmatpush1.bf16.msra.mxu0 %v1378
    %1679 = vmatprep.subr.bf16.mxu0 %v1377
    %1680 = vmatpush1.bf16.msra.mxu0 %v1376
    %1681 = vmatprep.subr.bf16.mxu0 %v1375
    %1682 = vmatpush1.bf16.msra.mxu0 %v1374
    %1683 = vmatprep.subr.bf16.mxu0 %v1373
    %1684 = vmatpush1.bf16.msra.mxu0 %v1372
    %1685 = vmatprep.subr.bf16.mxu0 %v1403
    %1686 = vmatpush2.bf16.msra.mxu0 %v1402
    %1687 = vmatprep.subr.bf16.mxu0 %v1401
    %1688 = vmatpush2.bf16.msra.mxu0 %v1400
    %1689 = vmatprep.subr.bf16.mxu0 %v1399
    %1690 = vmatpush2.bf16.msra.mxu0 %v1398
    %1691 = vmatprep.subr.bf16.mxu0 %v1397
    %1692 = vmatpush2.bf16.msra.mxu0 %v1396
    %1693 = vmatprep.subr.bf16.mxu0 %v1395
    %1694 = vmatpush2.bf16.msra.mxu0 %v1394
    %1695 = vmatprep.subr.bf16.mxu0 %v1393
    %1696 = vmatpush2.bf16.msra.mxu0 %v1392
    %1697 = vmatprep.subr.bf16.mxu0 %v1391
    %1698 = vmatpush2.bf16.msra.mxu0 %v1390
    %1699 = vmatprep.subr.bf16.mxu0 %v1389
    %1700 = vmatpush2.bf16.msra.mxu0 %v1388
    %1701 = vmatprep.mubr.bf16.mxu0 %v799
    %1702 = vmatmul.mubr.bf16.gmra.mxu0 %v798
    %v1703 = vpop.f32.mrf.mxu0
    %v1704 = vadd.f32 %v1631, %v1703
    %v1705 = vpop.f32.mrf.mxu0
    %v1706 = vadd.f32 %v1633, %v1705
    %v1707 = vpop.f32.mrf.mxu0
    %v1708 = vadd.f32 %v1635, %v1707
    %v1709 = vpop.f32.mrf.mxu0
    %v1710 = vadd.f32 %v1637, %v1709
    %1711 = vmatprep.mubr.bf16.mxu0 %v807
    %1712 = vmatmul.mubr.bf16.gmra.mxu0 %v806
    %v1713 = vpop.f32.mrf.mxu0
    %v1714 = vadd.f32 %v1641, %v1713
    %v1715 = vpop.f32.mrf.mxu0
    %v1716 = vadd.f32 %v1643, %v1715
    %v1717 = vpop.f32.mrf.mxu0
    %v1718 = vadd.f32 %v1645, %v1717
    %v1719 = vpop.f32.mrf.mxu0
    %v1720 = vadd.f32 %v1647, %v1719
    %1721 = vmatprep.mubr.bf16.mxu0 %v815
    %1722 = vmatmul.mubr.bf16.gmra.mxu0 %v814
    %v1723 = vpop.f32.mrf.mxu0
    %v1724 = vadd.f32 %v1651, %v1723
    %v1725 = vpop.f32.mrf.mxu0
    %v1726 = vadd.f32 %v1653, %v1725
    %v1727 = vpop.f32.mrf.mxu0
    %v1728 = vadd.f32 %v1655, %v1727
    %v1729 = vpop.f32.mrf.mxu0
    %v1730 = vadd.f32 %v1657, %v1729
    %1731 = vmatprep.mubr.bf16.mxu0 %v823
    %1732 = vmatmul.mubr.bf16.gmra.mxu0 %v822
    %v1733 = vpop.f32.mrf.mxu0
    %v1734 = vadd.f32 %v1661, %v1733
    %v1735 = vpop.f32.mrf.mxu0
    %v1736 = vadd.f32 %v1663, %v1735
    %v1737 = vpop.f32.mrf.mxu0
    %v1738 = vadd.f32 %v1665, %v1737
    %v1739 = vpop.f32.mrf.mxu0
    %v1740 = vadd.f32 %v1667, %v1739
    %1741 = vdwg.mxu0
    %1742 = vmatprep.subr.bf16.mxu0 %v1419
    %1743 = vmatpush1.bf16.msra.mxu0 %v1418
    %1744 = vmatprep.subr.bf16.mxu0 %v1417
    %1745 = vmatpush1.bf16.msra.mxu0 %v1416
    %1746 = vmatprep.subr.bf16.mxu0 %v1415
    %1747 = vmatpush1.bf16.msra.mxu0 %v1414
    %1748 = vmatprep.subr.bf16.mxu0 %v1413
    %1749 = vmatpush1.bf16.msra.mxu0 %v1412
    %1750 = vmatprep.subr.bf16.mxu0 %v1411
    %1751 = vmatpush1.bf16.msra.mxu0 %v1410
    %1752 = vmatprep.subr.bf16.mxu0 %v1409
    %1753 = vmatpush1.bf16.msra.mxu0 %v1408
    %1754 = vmatprep.subr.bf16.mxu0 %v1407
    %1755 = vmatpush1.bf16.msra.mxu0 %v1406
    %1756 = vmatprep.subr.bf16.mxu0 %v1405
    %1757 = vmatpush1.bf16.msra.mxu0 %v1404
    %1758 = vmatprep.subr.bf16.mxu0 %v1435
    %1759 = vmatpush2.bf16.msra.mxu0 %v1434
    %1760 = vmatprep.subr.bf16.mxu0 %v1433
    %1761 = vmatpush2.bf16.msra.mxu0 %v1432
    %1762 = vmatprep.subr.bf16.mxu0 %v1431
    %1763 = vmatpush2.bf16.msra.mxu0 %v1430
    %1764 = vmatprep.subr.bf16.mxu0 %v1429
    %1765 = vmatpush2.bf16.msra.mxu0 %v1428
    %1766 = vmatprep.subr.bf16.mxu0 %v1427
    %1767 = vmatpush2.bf16.msra.mxu0 %v1426
    %1768 = vmatprep.subr.bf16.mxu0 %v1425
    %1769 = vmatpush2.bf16.msra.mxu0 %v1424
    %1770 = vmatprep.subr.bf16.mxu0 %v1423
    %1771 = vmatpush2.bf16.msra.mxu0 %v1422
    %1772 = vmatprep.subr.bf16.mxu0 %v1421
    %1773 = vmatpush2.bf16.msra.mxu0 %v1420
    %1774 = vmatprep.mubr.bf16.mxu0 %v801
    %1775 = vmatmul.mubr.bf16.gmra.mxu0 %v800
    %v1776 = vpop.f32.mrf.mxu0
    %v1777 = vadd.f32 %v1704, %v1776
    %v1778 = vpop.f32.mrf.mxu0
    %v1779 = vadd.f32 %v1706, %v1778
    %v1780 = vpop.f32.mrf.mxu0
    %v1781 = vadd.f32 %v1708, %v1780
    %v1782 = vpop.f32.mrf.mxu0
    %v1783 = vadd.f32 %v1710, %v1782
    %1784 = vmatprep.mubr.bf16.mxu0 %v809
    %1785 = vmatmul.mubr.bf16.gmra.mxu0 %v808
    %v1786 = vpop.f32.mrf.mxu0
    %v1787 = vadd.f32 %v1714, %v1786
    %v1788 = vpop.f32.mrf.mxu0
    %v1789 = vadd.f32 %v1716, %v1788
    %v1790 = vpop.f32.mrf.mxu0
    %v1791 = vadd.f32 %v1718, %v1790
    %v1792 = vpop.f32.mrf.mxu0
    %v1793 = vadd.f32 %v1720, %v1792
    %1794 = vmatprep.mubr.bf16.mxu0 %v817
    %1795 = vmatmul.mubr.bf16.gmra.mxu0 %v816
    %v1796 = vpop.f32.mrf.mxu0
    %v1797 = vadd.f32 %v1724, %v1796
    %v1798 = vpop.f32.mrf.mxu0
    %v1799 = vadd.f32 %v1726, %v1798
    %v1800 = vpop.f32.mrf.mxu0
    %v1801 = vadd.f32 %v1728, %v1800
    %v1802 = vpop.f32.mrf.mxu0
    %v1803 = vadd.f32 %v1730, %v1802
    %1804 = vmatprep.mubr.bf16.mxu0 %v825
    %1805 = vmatmul.mubr.bf16.gmra.mxu0 %v824
    %v1806 = vpop.f32.mrf.mxu0
    %v1807 = vadd.f32 %v1734, %v1806
    %v1808 = vpop.f32.mrf.mxu0
    %v1809 = vadd.f32 %v1736, %v1808
    %v1810 = vpop.f32.mrf.mxu0
    %v1811 = vadd.f32 %v1738, %v1810
    %v1812 = vpop.f32.mrf.mxu0
    %v1813 = vadd.f32 %v1740, %v1812
    %1814 = vdwg.mxu0
    %1815 = vmatprep.subr.bf16.mxu0 %v1451
    %1816 = vmatpush1.bf16.msra.mxu0 %v1450
    %1817 = vmatprep.subr.bf16.mxu0 %v1449
    %1818 = vmatpush1.bf16.msra.mxu0 %v1448
    %1819 = vmatprep.subr.bf16.mxu0 %v1447
    %1820 = vmatpush1.bf16.msra.mxu0 %v1446
    %1821 = vmatprep.subr.bf16.mxu0 %v1445
    %1822 = vmatpush1.bf16.msra.mxu0 %v1444
    %1823 = vmatprep.subr.bf16.mxu0 %v1443
    %1824 = vmatpush1.bf16.msra.mxu0 %v1442
    %1825 = vmatprep.subr.bf16.mxu0 %v1441
    %1826 = vmatpush1.bf16.msra.mxu0 %v1440
    %1827 = vmatprep.subr.bf16.mxu0 %v1439
    %1828 = vmatpush1.bf16.msra.mxu0 %v1438
    %1829 = vmatprep.subr.bf16.mxu0 %v1437
    %1830 = vmatpush1.bf16.msra.mxu0 %v1436
    %1831 = vmatprep.subr.bf16.mxu0 %v1467
    %1832 = vmatpush2.bf16.msra.mxu0 %v1466
    %1833 = vmatprep.subr.bf16.mxu0 %v1465
    %1834 = vmatpush2.bf16.msra.mxu0 %v1464
    %1835 = vmatprep.subr.bf16.mxu0 %v1463
    %1836 = vmatpush2.bf16.msra.mxu0 %v1462
    %1837 = vmatprep.subr.bf16.mxu0 %v1461
    %1838 = vmatpush2.bf16.msra.mxu0 %v1460
    %1839 = vmatprep.subr.bf16.mxu0 %v1459
    %1840 = vmatpush2.bf16.msra.mxu0 %v1458
    %1841 = vmatprep.subr.bf16.mxu0 %v1457
    %1842 = vmatpush2.bf16.msra.mxu0 %v1456
    %1843 = vmatprep.subr.bf16.mxu0 %v1455
    %1844 = vmatpush2.bf16.msra.mxu0 %v1454
    %1845 = vmatprep.subr.bf16.mxu0 %v1453
    %1846 = vmatpush2.bf16.msra.mxu0 %v1452
    %1847 = vmatprep.mubr.bf16.mxu0 %v803
    %1848 = vmatmul.mubr.bf16.gmra.mxu0 %v802
    %v1849 = vpop.f32.mrf.mxu0
    %v1850 = vadd.f32 %v1777, %v1849
    %v1851 = vpop.f32.mrf.mxu0
    %v1852 = vadd.f32 %v1779, %v1851
    %v1853 = vpop.f32.mrf.mxu0
    %v1854 = vadd.f32 %v1781, %v1853
    %v1855 = vpop.f32.mrf.mxu0
    %v1856 = vadd.f32 %v1783, %v1855
    %1857 = vmatprep.mubr.bf16.mxu0 %v811
    %1858 = vmatmul.mubr.bf16.gmra.mxu0 %v810
    %v1859 = vpop.f32.mrf.mxu0
    %v1860 = vadd.f32 %v1787, %v1859
    %v1861 = vpop.f32.mrf.mxu0
    %v1862 = vadd.f32 %v1789, %v1861
    %v1863 = vpop.f32.mrf.mxu0
    %v1864 = vadd.f32 %v1791, %v1863
    %v1865 = vpop.f32.mrf.mxu0
    %v1866 = vadd.f32 %v1793, %v1865
    %1867 = vmatprep.mubr.bf16.mxu0 %v819
    %1868 = vmatmul.mubr.bf16.gmra.mxu0 %v818
    %v1869 = vpop.f32.mrf.mxu0
    %v1870 = vadd.f32 %v1797, %v1869
    %v1871 = vpop.f32.mrf.mxu0
    %v1872 = vadd.f32 %v1799, %v1871
    %v1873 = vpop.f32.mrf.mxu0
    %v1874 = vadd.f32 %v1801, %v1873
    %v1875 = vpop.f32.mrf.mxu0
    %v1876 = vadd.f32 %v1803, %v1875
    %1877 = vmatprep.mubr.bf16.mxu0 %v827
    %1878 = vmatmul.mubr.bf16.gmra.mxu0 %v826
    %v1879 = vpop.f32.mrf.mxu0
    %v1880 = vadd.f32 %v1807, %v1879
    %v1881 = vpop.f32.mrf.mxu0
    %v1882 = vadd.f32 %v1809, %v1881
    %v1883 = vpop.f32.mrf.mxu0
    %v1884 = vadd.f32 %v1811, %v1883
    %v1885 = vpop.f32.mrf.mxu0
    %v1886 = vadd.f32 %v1813, %v1885
    %1887 = vdwg.mxu0
    %1888 = vst [vmem:[#allocation7] sm:$0xff] %v1850
    %1889 = vst [vmem:[#allocation7 + $0x8] sm:$0xff] %v1852
    %1890 = vst [vmem:[#allocation7 + $0x10] sm:$0xff] %v1854
    %1891 = vst [vmem:[#allocation7 + $0x18] sm:$0xff] %v1856
    %1892 = vst [vmem:[#allocation7 + $0x20] sm:$0xff] %v1860
    %1893 = vst [vmem:[#allocation7 + $0x28] sm:$0xff] %v1862
    %1894 = vst [vmem:[#allocation7 + $0x30] sm:$0xff] %v1864
    %1895 = vst [vmem:[#allocation7 + $0x38] sm:$0xff] %v1866
    %1896 = vst [vmem:[#allocation7 + $0x40] sm:$0xff] %v1870
    %1897 = vst [vmem:[#allocation7 + $0x48] sm:$0xff] %v1872
    %1898 = vst [vmem:[#allocation7 + $0x50] sm:$0xff] %v1874
    %1899 = vst [vmem:[#allocation7 + $0x58] sm:$0xff] %v1876
    %1900 = vst [vmem:[#allocation7 + $0x60] sm:$0xff] %v1880
    %1901 = vst [vmem:[#allocation7 + $0x68] sm:$0xff] %v1882
    %1902 = vst [vmem:[#allocation7 + $0x70] sm:$0xff] %v1884
    %1903 = vst [vmem:[#allocation7 + $0x78] sm:$0xff] %v1886
    // Predicated region
    $region22: #{tpu_custom_call.1} parent=1 // pred_check
      _
    $region23: #{tpu_custom_call.1} parent=1 // pred_check_branch
      %1905 = sbr.rel (0) target = $region25
    $region24: #{tpu_custom_call.1} parent=1 // pred_region
      %s1907 = ssub.s32 2048, 2048
      %1908 = vsyncadd [#allocation4], %s1907
      %s1909 = sshll.u32 [#allocation7], 4
      %s1910 = int_to_ptr.vmem [resolvable:$true] %s1909
      %1915 = dma.vmem_to_hbm [thread:$0]  %s1910, 2048, %s3, [#allocation4], 256, 256, 16
    $region25: #{tpu_custom_call.1} parent=1 // pred_fallthru
      _
    // Predicated region
    $region26: #{tpu_custom_call.1} parent=1 // pred_check
      _
    $region27: #{tpu_custom_call.1} parent=1 // pred_check_branch
      %1917 = sbr.rel (0) target = $region29
    $region28: #{tpu_custom_call.1} parent=1 // pred_region
      %1918 = dma.done [#allocation4], 2048
    $region29: #{tpu_custom_call.1} parent=1 // pred_fallthru
      _
    %1919 = vsyncpa [#allocation3], 1
    %1920 = vsyncpa [#allocation6], 1
    %1921 = vsyncpa [#allocation4], 1

</llo_original>
